<compile_context>
chip_gen: v6e
topology: v6e:2x2x1
jax: 0.10.0
libtpu: 0.0.40
codegen_flags: <defaults>
</compile_context>

<pallas_src>
import jax
import jax.numpy as jnp
from jax import lax
from jax.experimental import pallas as pl
from jax.experimental.pallas import tpu as pltpu

EPS = 1e-5
LANE = 128


def _round_up(x, m):
    return (x + m - 1) // m * m


# -----------------------------------------------------------------------------
# Pass 1: 3x3 conv (tap-wise MXU matmuls) + per-tile BN partial statistics.
# -----------------------------------------------------------------------------
def _conv_stats_kernel(body_ref, halo_ref, w_ref, y_ref, stats_ref, win_ref):
    # body_ref : (TH,   Wp, Ci)  padded-input rows [t*TH, t*TH+TH)
    # halo_ref : (2,    Wp, Ci)  padded-input rows [t*TH+TH, t*TH+TH+2)
    # w_ref    : (9, Ci, Co)     tap-major conv weights
    # y_ref    : (TH, W, Co)     conv output tile (pre-BN), f32
    # stats_ref: (2, Co)         [sum, sum-of-squares] over this tile
    # win_ref  : (TH+2, Wp, Ci)  VMEM scratch: assembled halo window
    TH, Wp, _ = body_ref.shape
    _, W, Cout = y_ref.shape

    # Assemble the (TH+2)-row window in VMEM; the tap loop reads slices from the
    # ref so only one shifted patch is live in vregs at a time.
    win_ref[0:TH] = body_ref[...]
    win_ref[TH:TH + 2] = halo_ref[...]

    acc = jnp.zeros((TH * W, Cout), jnp.float32)
    for kh in range(3):
        for kw in range(3):
            patch = win_ref[kh:kh + TH, kw:kw + W, :]            # (TH, W, Ci)
            patch2d = patch.reshape(TH * W, patch.shape[-1])
            acc = acc + jnp.dot(patch2d, w_ref[kh * 3 + kw],
                                preferred_element_type=jnp.float32)

    y_ref[...] = acc.reshape(TH, W, Cout)

    # BN partials: sum and sum-of-squares from the same in-vreg traversal.
    s = jnp.sum(acc, axis=0, keepdims=True)                      # (1, Co)
    sq = jnp.sum(acc * acc, axis=0, keepdims=True)               # (1, Co)
    stats_ref[...] = jnp.concatenate([s, sq], axis=0)


# -----------------------------------------------------------------------------
# Pass 2: BatchNorm apply (y*scale + shift) fused with PReLU, elementwise, tiled.
# -----------------------------------------------------------------------------
def _bn_prelu_kernel(y_ref, scale_ref, shift_ref, alpha_ref, o_ref):
    scale = scale_ref[...].reshape(1, 1, -1)
    shift = shift_ref[...].reshape(1, 1, -1)
    alpha = alpha_ref[...].reshape(1, 1, -1)
    z = y_ref[...] * scale + shift
    o_ref[...] = jnp.where(z >= 0, z, alpha * z)


# -----------------------------------------------------------------------------
# Wrapper
# -----------------------------------------------------------------------------
def unet_block_pallas(x_nchw, params, *, tile_h=8, mxu_dtype=jnp.float32):
    """UnetBlock.forward: conv1 -> bn1 (batch stats, biased var) -> prelu1. NCHW in/out."""
    N, Cin, H, W = x_nchw.shape
    Cout = params["w1"].shape[0]
    assert params["w1"].shape[1] == Cin

    if H % tile_h != 0:
        tile_h = H                       # fall back to one row-tile per image
    assert tile_h % 2 == 0, "tile_h must be even (halo block is 2 rows)"
    n_tiles = H // tile_h

    Cpin = _round_up(Cin, LANE)          # lane-dense input channels
    Cpout = _round_up(Cout, LANE)        # lane-dense output channels (MXU N-dim)
    Wp = W + 2
    Hp = _round_up(H + 2, tile_h)        # 1-px halo + rows rounded up to the tile

    # Single pad pass: NHWC + spatial halo + channel padding (zeros -> exact math).
    x = jnp.transpose(x_nchw, (0, 2, 3, 1)).astype(mxu_dtype)
    xpad = jnp.pad(x, ((0, 0), (1, Hp - H - 1), (1, 1), (0, Cpin - Cin)))

    # (Cout, Cin, 3, 3) -> tap-major (9, Cpin, Cpout), zero-padded channels.
    w = jnp.transpose(params["w1"].astype(mxu_dtype), (2, 3, 1, 0)).reshape(9, Cin, Cout)
    w = jnp.pad(w, ((0, 0), (0, Cpin - Cin), (0, Cpout - Cout)))

    cparams = pltpu.CompilerParams(
        dimension_semantics=("parallel", "parallel"),
        vmem_limit_bytes=32 * 1024 * 1024,
    )

    y, stats = pl.pallas_call(
        _conv_stats_kernel,
        grid=(N, n_tiles),
        in_specs=[
            # body rows of the tile
            pl.BlockSpec((None, tile_h, Wp, Cpin), lambda n, t: (n, t, 0, 0)),
            # 2-row halo just below the tile (block index in units of 2 rows)
            pl.BlockSpec((None, 2, Wp, Cpin),
                         lambda n, t: (n, (t + 1) * (tile_h // 2), 0, 0)),
            # full weight tensor, resident across the grid
            pl.BlockSpec((9, Cpin, Cpout), lambda n, t: (0, 0, 0)),
        ],
        out_specs=[
            pl.BlockSpec((None, tile_h, W, Cpout), lambda n, t: (n, t, 0, 0)),
            pl.BlockSpec((None, None, 2, Cpout), lambda n, t: (n, t, 0, 0)),
        ],
        out_shape=[
            jax.ShapeDtypeStruct((N, H, W, Cpout), jnp.float32),
            jax.ShapeDtypeStruct((N, n_tiles, 2, Cpout), jnp.float32),
        ],
        scratch_shapes=[pltpu.VMEM((tile_h + 2, Wp, Cpin), mxu_dtype)],
        compiler_params=cparams,
    )(xpad, xpad, w)

    # Tiny per-channel reduction of the per-tile partials (plain XLA, O(C) work).
    cnt = float(N * H * W)
    total = jnp.sum(stats[:, :, 0, :], axis=(0, 1))              # (Cpout,)
    total_sq = jnp.sum(stats[:, :, 1, :], axis=(0, 1))           # (Cpout,)
    mean = total / cnt
    var = total_sq / cnt - mean * mean                           # biased variance
    inv = lax.rsqrt(var + EPS)

    gamma = jnp.pad(params["gamma1"].astype(jnp.float32), (0, Cpout - Cout))
    beta = jnp.pad(params["beta1"].astype(jnp.float32), (0, Cpout - Cout))
    scale = (gamma * inv).reshape(1, Cpout)
    shift = (beta - mean * gamma * inv).reshape(1, Cpout)

    alpha_p = params["alpha"].astype(jnp.float32).reshape(-1)
    if alpha_p.shape[0] == 1:
        alpha = jnp.broadcast_to(alpha_p, (Cpout,))
    else:
        alpha = jnp.pad(alpha_p, (0, Cpout - Cout))
    alpha = alpha.reshape(1, Cpout)
    # TODO(synk): running_mean / running_var buffer updates (training-time side effect of
    # nn.BatchNorm2d) are not materialized; only the forward output is produced.

    out_nhwc = pl.pallas_call(
        _bn_prelu_kernel,
        grid=(N, n_tiles),
        in_specs=[
            pl.BlockSpec((None, tile_h, W, Cpout), lambda n, t: (n, t, 0, 0)),
            pl.BlockSpec((1, Cpout), lambda n, t: (0, 0)),
            pl.BlockSpec((1, Cpout), lambda n, t: (0, 0)),
            pl.BlockSpec((1, Cpout), lambda n, t: (0, 0)),
        ],
        out_specs=pl.BlockSpec((None, tile_h, W, Cpout), lambda n, t: (n, t, 0, 0)),
        out_shape=jax.ShapeDtypeStruct((N, H, W, Cpout), jnp.float32),
        compiler_params=cparams,
    )(y, scale, shift, alpha)

    out = out_nhwc[:, :, :, :Cout]                   # strip channel padding
    return jnp.transpose(out, (0, 3, 1, 2))          # back to NCHW


# -----------------------------------------------------------------------------
# Pure-JAX reference (mirrors the PyTorch forward, including the conv bias).
# -----------------------------------------------------------------------------
def unet_block_ref(x, p):
    y = lax.conv_general_dilated(
        x, p["w1"], (1, 1), "SAME",
        dimension_numbers=("NCHW", "OIHW", "NCHW"),
        precision=lax.Precision.HIGHEST)
    y = y + p["b1"].reshape(1, -1, 1, 1)
    mean = jnp.mean(y, axis=(0, 2, 3), keepdims=True)
    var = jnp.mean((y - mean) ** 2, axis=(0, 2, 3), keepdims=True)   # biased
    y = (y - mean) * lax.rsqrt(var + EPS)
    y = y * p["gamma1"].reshape(1, -1, 1, 1) + p["beta1"].reshape(1, -1, 1, 1)
    alpha = p["alpha"].reshape(1, -1, 1, 1)
    return jnp.where(y >= 0, y, alpha * y)


if __name__ == "__main__":
    key = jax.random.PRNGKey(0)
    N, channels, features, H, W = 2, 4, 32, 16, 16
    ks = jax.random.split(key, 5)

    fan_in = channels * 3 * 3
    bound = 1.0 / (fan_in ** 0.5)
    params = {
        "w1": jax.random.uniform(ks[0], (features, channels, 3, 3),
                                 jnp.float32, -bound, bound),
        "b1": jax.random.uniform(ks[1], (features,), jnp.float32, -bound, bound),
        "gamma1": 1.0 + 0.1 * jax.random.normal(ks[2], (features,), jnp.float32),
        "beta1": 0.1 * jax.random.normal(ks[3], (features,), jnp.float32),
        "alpha": jnp.full((1,), 0.25, jnp.float32),   # nn.PReLU() default
    }
    x = jax.random.normal(ks[4], (N, channels, H, W), jnp.float32)

    out = jax.block_until_ready(unet_block_pallas(x, params))
    ref = jax.block_until_ready(unet_block_ref(x, params))

    assert out.shape == (N, features, H, W), out.shape
    max_err = float(jnp.max(jnp.abs(out - ref)))
    assert jnp.allclose(out, ref, rtol=1e-3, atol=1e-3), max_err
    print("KERNEL_OK")
</pallas_src>

<mosaic_0001>
module attributes {stable_mosaic.version = 11 : i64} {
  func.func @_conv_stats_kernel(%arg0: i32, %arg1: i32, %arg2: memref<1x8x18x128xf32, #tpu.memory_space<vmem>>, %arg3: memref<1x2x18x128xf32, #tpu.memory_space<vmem>>, %arg4: memref<9x128x128xf32, #tpu.memory_space<vmem>>, %arg5: memref<1x8x16x128xf32, #tpu.memory_space<vmem>>, %arg6: memref<1x1x2x128xf32, #tpu.memory_space<vmem>>, %arg7: memref<10x18x128xf32, #tpu.memory_space<vmem>>) attributes {dimension_semantics = [#tpu.dimension_semantics<parallel>, #tpu.dimension_semantics<parallel>], iteration_bounds = array<i64: 2, 2>, scalar_prefetch = 0 : i64, scratch_operands = 1 : i64, tpu.core_type = #tpu.core_type<tc>, window_params = [{transform_indices = @transform_0, window_bounds = array<i64: 1, 8, 18, 128>}, {transform_indices = @transform_1, window_bounds = array<i64: 1, 2, 18, 128>}, {pipeline_mode = #tpu.pipeline_mode<synchronous>, transform_indices = @transform_2, window_bounds = array<i64: 9, 128, 128>}, {transform_indices = @transform_3, window_bounds = array<i64: 1, 8, 16, 128>}, {transform_indices = @transform_4, window_bounds = array<i64: 1, 1, 2, 128>}]} {
    %c0 = arith.constant 0 : index
    %c0_0 = arith.constant 0 : index
    %c0_1 = arith.constant 0 : index
    %c0_2 = arith.constant 0 : index
    %0 = vector.load %arg2[%c0, %c0_0, %c0_1, %c0_2] : memref<1x8x18x128xf32, #tpu.memory_space<vmem>>, vector<1x8x18x128xf32>
    %1 = vector.shape_cast %0 : vector<1x8x18x128xf32> to vector<8x18x128xf32>
    %c0_3 = arith.constant 0 : index
    %c0_4 = arith.constant 0 : index
    %c0_5 = arith.constant 0 : index
    %2 = vector.load %arg7[%c0_3, %c0_4, %c0_5] : memref<10x18x128xf32, #tpu.memory_space<vmem>>, vector<8x18x128xf32>
    tpu.vector_store %arg7[%c0_3, %c0_4, %c0_5], %1 {strides = array<i32>} : memref<10x18x128xf32, #tpu.memory_space<vmem>>, vector<8x18x128xf32>,
    %c0_6 = arith.constant 0 : index
    %c0_7 = arith.constant 0 : index
    %c0_8 = arith.constant 0 : index
    %c0_9 = arith.constant 0 : index
    %3 = vector.load %arg3[%c0_6, %c0_7, %c0_8, %c0_9] : memref<1x2x18x128xf32, #tpu.memory_space<vmem>>, vector<1x2x18x128xf32>
    %4 = vector.shape_cast %3 : vector<1x2x18x128xf32> to vector<2x18x128xf32>
    %c8 = arith.constant 8 : index
    %c0_10 = arith.constant 0 : index
    %c0_11 = arith.constant 0 : index
    %5 = vector.load %arg7[%c8, %c0_10, %c0_11] : memref<10x18x128xf32, #tpu.memory_space<vmem>>, vector<2x18x128xf32>
    tpu.vector_store %arg7[%c8, %c0_10, %c0_11], %4 {strides = array<i32>} : memref<10x18x128xf32, #tpu.memory_space<vmem>>, vector<2x18x128xf32>,
    %cst = arith.constant 0.000000e+00 : f32
    %6 = vector.broadcast %cst : f32 to vector<128x128xf32>
    %c0_12 = arith.constant 0 : index
    %c0_13 = arith.constant 0 : index
    %c0_14 = arith.constant 0 : index
    %7 = vector.load %arg7[%c0_12, %c0_13, %c0_14] : memref<10x18x128xf32, #tpu.memory_space<vmem>>, vector<8x16x128xf32>
    %8 = vector.shape_cast %7 : vector<8x16x128xf32> to vector<128x128xf32>
    %c0_15 = arith.constant 0 : index
    %c0_16 = arith.constant 0 : index
    %c0_17 = arith.constant 0 : index
    %9 = vector.load %arg4[%c0_15, %c0_16, %c0_17] : memref<9x128x128xf32, #tpu.memory_space<vmem>>, vector<1x128x128xf32>
    %10 = vector.shape_cast %9 : vector<1x128x128xf32> to vector<128x128xf32>
    %cst_18 = arith.constant dense<0.000000e+00> : vector<128x128xf32>
    %11 = tpu.matmul %8, %10, %cst_18 {dimension_numbers = #tpu.dot_dimension_numbers<[1], [0], [0], [1], [0, 0, 1, 1], [], []>} : vector<128x128xf32>, vector<128x128xf32>, vector<128x128xf32> -> vector<128x128xf32>
    %12 = arith.addf %6, %11 : vector<128x128xf32>
    %c0_19 = arith.constant 0 : index
    %c1 = arith.constant 1 : index
    %c0_20 = arith.constant 0 : index
    %13 = vector.load %arg7[%c0_19, %c1, %c0_20] : memref<10x18x128xf32, #tpu.memory_space<vmem>>, vector<8x16x128xf32>
    %14 = vector.shape_cast %13 : vector<8x16x128xf32> to vector<128x128xf32>
    %c1_21 = arith.constant 1 : index
    %c0_22 = arith.constant 0 : index
    %c0_23 = arith.constant 0 : index
    %15 = vector.load %arg4[%c1_21, %c0_22, %c0_23] : memref<9x128x128xf32, #tpu.memory_space<vmem>>, vector<1x128x128xf32>
    %16 = vector.shape_cast %15 : vector<1x128x128xf32> to vector<128x128xf32>
    %cst_24 = arith.constant dense<0.000000e+00> : vector<128x128xf32>
    %17 = tpu.matmul %14, %16, %cst_24 {dimension_numbers = #tpu.dot_dimension_numbers<[1], [0], [0], [1], [0, 0, 1, 1], [], []>} : vector<128x128xf32>, vector<128x128xf32>, vector<128x128xf32> -> vector<128x128xf32>
    %18 = arith.addf %12, %17 : vector<128x128xf32>
    %c0_25 = arith.constant 0 : index
    %c2 = arith.constant 2 : index
    %c0_26 = arith.constant 0 : index
    %19 = vector.load %arg7[%c0_25, %c2, %c0_26] : memref<10x18x128xf32, #tpu.memory_space<vmem>>, vector<8x16x128xf32>
    %20 = vector.shape_cast %19 : vector<8x16x128xf32> to vector<128x128xf32>
    %c2_27 = arith.constant 2 : index
    %c0_28 = arith.constant 0 : index
    %c0_29 = arith.constant 0 : index
    %21 = vector.load %arg4[%c2_27, %c0_28, %c0_29] : memref<9x128x128xf32, #tpu.memory_space<vmem>>, vector<1x128x128xf32>
    %22 = vector.shape_cast %21 : vector<1x128x128xf32> to vector<128x128xf32>
    %cst_30 = arith.constant dense<0.000000e+00> : vector<128x128xf32>
    %23 = tpu.matmul %20, %22, %cst_30 {dimension_numbers = #tpu.dot_dimension_numbers<[1], [0], [0], [1], [0, 0, 1, 1], [], []>} : vector<128x128xf32>, vector<128x128xf32>, vector<128x128xf32> -> vector<128x128xf32>
    %24 = arith.addf %18, %23 : vector<128x128xf32>
    %c1_31 = arith.constant 1 : index
    %c0_32 = arith.constant 0 : index
    %c0_33 = arith.constant 0 : index
    %25 = vector.load %arg7[%c1_31, %c0_32, %c0_33] : memref<10x18x128xf32, #tpu.memory_space<vmem>>, vector<8x16x128xf32>
    %26 = vector.shape_cast %25 : vector<8x16x128xf32> to vector<128x128xf32>
    %c3 = arith.constant 3 : index
    %c0_34 = arith.constant 0 : index
    %c0_35 = arith.constant 0 : index
    %27 = vector.load %arg4[%c3, %c0_34, %c0_35] : memref<9x128x128xf32, #tpu.memory_space<vmem>>, vector<1x128x128xf32>
    %28 = vector.shape_cast %27 : vector<1x128x128xf32> to vector<128x128xf32>
    %cst_36 = arith.constant dense<0.000000e+00> : vector<128x128xf32>
    %29 = tpu.matmul %26, %28, %cst_36 {dimension_numbers = #tpu.dot_dimension_numbers<[1], [0], [0], [1], [0, 0, 1, 1], [], []>} : vector<128x128xf32>, vector<128x128xf32>, vector<128x128xf32> -> vector<128x128xf32>
    %30 = arith.addf %24, %29 : vector<128x128xf32>
    %c1_37 = arith.constant 1 : index
    %c1_38 = arith.constant 1 : index
    %c0_39 = arith.constant 0 : index
    %31 = vector.load %arg7[%c1_37, %c1_38, %c0_39] : memref<10x18x128xf32, #tpu.memory_space<vmem>>, vector<8x16x128xf32>
    %32 = vector.shape_cast %31 : vector<8x16x128xf32> to vector<128x128xf32>
    %c4 = arith.constant 4 : index
    %c0_40 = arith.constant 0 : index
    %c0_41 = arith.constant 0 : index
    %33 = vector.load %arg4[%c4, %c0_40, %c0_41] : memref<9x128x128xf32, #tpu.memory_space<vmem>>, vector<1x128x128xf32>
    %34 = vector.shape_cast %33 : vector<1x128x128xf32> to vector<128x128xf32>
    %cst_42 = arith.constant dense<0.000000e+00> : vector<128x128xf32>
    %35 = tpu.matmul %32, %34, %cst_42 {dimension_numbers = #tpu.dot_dimension_numbers<[1], [0], [0], [1], [0, 0, 1, 1], [], []>} : vector<128x128xf32>, vector<128x128xf32>, vector<128x128xf32> -> vector<128x128xf32>
    %36 = arith.addf %30, %35 : vector<128x128xf32>
    %c1_43 = arith.constant 1 : index
    %c2_44 = arith.constant 2 : index
    %c0_45 = arith.constant 0 : index
    %37 = vector.load %arg7[%c1_43, %c2_44, %c0_45] : memref<10x18x128xf32, #tpu.memory_space<vmem>>, vector<8x16x128xf32>
    %38 = vector.shape_cast %37 : vector<8x16x128xf32> to vector<128x128xf32>
    %c5 = arith.constant 5 : index
    %c0_46 = arith.constant 0 : index
    %c0_47 = arith.constant 0 : index
    %39 = vector.load %arg4[%c5, %c0_46, %c0_47] : memref<9x128x128xf32, #tpu.memory_space<vmem>>, vector<1x128x128xf32>
    %40 = vector.shape_cast %39 : vector<1x128x128xf32> to vector<128x128xf32>
    %cst_48 = arith.constant dense<0.000000e+00> : vector<128x128xf32>
    %41 = tpu.matmul %38, %40, %cst_48 {dimension_numbers = #tpu.dot_dimension_numbers<[1], [0], [0], [1], [0, 0, 1, 1], [], []>} : vector<128x128xf32>, vector<128x128xf32>, vector<128x128xf32> -> vector<128x128xf32>
    %42 = arith.addf %36, %41 : vector<128x128xf32>
    %c2_49 = arith.constant 2 : index
    %c0_50 = arith.constant 0 : index
    %c0_51 = arith.constant 0 : index
    %43 = vector.load %arg7[%c2_49, %c0_50, %c0_51] : memref<10x18x128xf32, #tpu.memory_space<vmem>>, vector<8x16x128xf32>
    %44 = vector.shape_cast %43 : vector<8x16x128xf32> to vector<128x128xf32>
    %c6 = arith.constant 6 : index
    %c0_52 = arith.constant 0 : index
    %c0_53 = arith.constant 0 : index
    %45 = vector.load %arg4[%c6, %c0_52, %c0_53] : memref<9x128x128xf32, #tpu.memory_space<vmem>>, vector<1x128x128xf32>
    %46 = vector.shape_cast %45 : vector<1x128x128xf32> to vector<128x128xf32>
    %cst_54 = arith.constant dense<0.000000e+00> : vector<128x128xf32>
    %47 = tpu.matmul %44, %46, %cst_54 {dimension_numbers = #tpu.dot_dimension_numbers<[1], [0], [0], [1], [0, 0, 1, 1], [], []>} : vector<128x128xf32>, vector<128x128xf32>, vector<128x128xf32> -> vector<128x128xf32>
    %48 = arith.addf %42, %47 : vector<128x128xf32>
    %c2_55 = arith.constant 2 : index
    %c1_56 = arith.constant 1 : index
    %c0_57 = arith.constant 0 : index
    %49 = vector.load %arg7[%c2_55, %c1_56, %c0_57] : memref<10x18x128xf32, #tpu.memory_space<vmem>>, vector<8x16x128xf32>
    %50 = vector.shape_cast %49 : vector<8x16x128xf32> to vector<128x128xf32>
    %c7 = arith.constant 7 : index
    %c0_58 = arith.constant 0 : index
    %c0_59 = arith.constant 0 : index
    %51 = vector.load %arg4[%c7, %c0_58, %c0_59] : memref<9x128x128xf32, #tpu.memory_space<vmem>>, vector<1x128x128xf32>
    %52 = vector.shape_cast %51 : vector<1x128x128xf32> to vector<128x128xf32>
    %cst_60 = arith.constant dense<0.000000e+00> : vector<128x128xf32>
    %53 = tpu.matmul %50, %52, %cst_60 {dimension_numbers = #tpu.dot_dimension_numbers<[1], [0], [0], [1], [0, 0, 1, 1], [], []>} : vector<128x128xf32>, vector<128x128xf32>, vector<128x128xf32> -> vector<128x128xf32>
    %54 = arith.addf %48, %53 : vector<128x128xf32>
    %c2_61 = arith.constant 2 : index
    %c2_62 = arith.constant 2 : index
    %c0_63 = arith.constant 0 : index
    %55 = vector.load %arg7[%c2_61, %c2_62, %c0_63] : memref<10x18x128xf32, #tpu.memory_space<vmem>>, vector<8x16x128xf32>
    %56 = vector.shape_cast %55 : vector<8x16x128xf32> to vector<128x128xf32>
    %c8_64 = arith.constant 8 : index
    %c0_65 = arith.constant 0 : index
    %c0_66 = arith.constant 0 : index
    %57 = vector.load %arg4[%c8_64, %c0_65, %c0_66] : memref<9x128x128xf32, #tpu.memory_space<vmem>>, vector<1x128x128xf32>
    %58 = vector.shape_cast %57 : vector<1x128x128xf32> to vector<128x128xf32>
    %cst_67 = arith.constant dense<0.000000e+00> : vector<128x128xf32>
    %59 = tpu.matmul %56, %58, %cst_67 {dimension_numbers = #tpu.dot_dimension_numbers<[1], [0], [0], [1], [0, 0, 1, 1], [], []>} : vector<128x128xf32>, vector<128x128xf32>, vector<128x128xf32> -> vector<128x128xf32>
    %60 = arith.addf %54, %59 : vector<128x128xf32>
    %61 = vector.shape_cast %60 : vector<128x128xf32> to vector<8x16x128xf32>
    %c0_68 = arith.constant 0 : index
    %c0_69 = arith.constant 0 : index
    %c0_70 = arith.constant 0 : index
    %c0_71 = arith.constant 0 : index
    %62 = vector.load %arg5[%c0_68, %c0_69, %c0_70, %c0_71] : memref<1x8x16x128xf32, #tpu.memory_space<vmem>>, vector<1x8x16x128xf32>
    %63 = vector.shape_cast %62 : vector<1x8x16x128xf32> to vector<8x16x128xf32>
    %64 = vector.shape_cast %61 : vector<8x16x128xf32> to vector<1x8x16x128xf32>
    tpu.vector_store %arg5[%c0_68, %c0_69, %c0_70, %c0_71], %64 {strides = array<i32>} : memref<1x8x16x128xf32, #tpu.memory_space<vmem>>, vector<1x8x16x128xf32>,
    %cst_72 = arith.constant dense<0.000000e+00> : vector<128xf32>
    %65 = vector.multi_reduction <add>, %60, %cst_72 [0] : vector<128x128xf32> to vector<128xf32>
    %66 = vector.shape_cast %65 : vector<128xf32> to vector<1x128xf32>
    %67 = arith.mulf %60, %60 : vector<128x128xf32>
    %cst_73 = arith.constant dense<0.000000e+00> : vector<128xf32>
    %68 = vector.multi_reduction <add>, %67, %cst_73 [0] : vector<128x128xf32> to vector<128xf32>
    %69 = vector.shape_cast %68 : vector<128xf32> to vector<1x128xf32>
    %70 = tpu.concatenate %66, %69 in 0 : vector<1x128xf32>, vector<1x128xf32> -> vector<2x128xf32>
    %c0_74 = arith.constant 0 : index
    %c0_75 = arith.constant 0 : index
    %c0_76 = arith.constant 0 : index
    %c0_77 = arith.constant 0 : index
    %71 = vector.load %arg6[%c0_74, %c0_75, %c0_76, %c0_77] : memref<1x1x2x128xf32, #tpu.memory_space<vmem>>, vector<1x1x2x128xf32>
    %72 = vector.shape_cast %71 : vector<1x1x2x128xf32> to vector<2x128xf32>
    %73 = vector.shape_cast %70 : vector<2x128xf32> to vector<1x1x2x128xf32>
    tpu.vector_store %arg6[%c0_74, %c0_75, %c0_76, %c0_77], %73 {strides = array<i32>} : memref<1x1x2x128xf32, #tpu.memory_space<vmem>>, vector<1x1x2x128xf32>,
    return
  }
  func.func @transform_0(%arg0: i32, %arg1: i32) -> (i32, i32, i32, i32) {
    %c0_i32 = arith.constant 0 : i32
    %c0_i32_0 = arith.constant 0 : i32
    %c0_i32_1 = arith.constant 0 : i32
    return %arg0, %arg1, %c0_i32, %c0_i32_0 : i32, i32, i32, i32
  }
  func.func @transform_1(%arg0: i32, %arg1: i32) -> (i32, i32, i32, i32) {
    %c1_i32 = arith.constant 1 : i32
    %0 = arith.addi %arg1, %c1_i32 : i32
    %c4_i32 = arith.constant 4 : i32
    %1 = arith.muli %0, %c4_i32 : i32
    %c0_i32 = arith.constant 0 : i32
    %c0_i32_0 = arith.constant 0 : i32
    %c0_i32_1 = arith.constant 0 : i32
    return %arg0, %1, %c0_i32, %c0_i32_0 : i32, i32, i32, i32
  }
  func.func @transform_2(%arg0: i32, %arg1: i32) -> (i32, i32, i32) {
    %c0_i32 = arith.constant 0 : i32
    %c0_i32_0 = arith.constant 0 : i32
    %c0_i32_1 = arith.constant 0 : i32
    %c0_i32_2 = arith.constant 0 : i32
    return %c0_i32, %c0_i32_0, %c0_i32_1 : i32, i32, i32
  }
  func.func @transform_3(%arg0: i32, %arg1: i32) -> (i32, i32, i32, i32) {
    %c0_i32 = arith.constant 0 : i32
    %c0_i32_0 = arith.constant 0 : i32
    %c0_i32_1 = arith.constant 0 : i32
    return %arg0, %arg1, %c0_i32, %c0_i32_0 : i32, i32, i32, i32
  }
  func.func @transform_4(%arg0: i32, %arg1: i32) -> (i32, i32, i32, i32) {
    %c0_i32 = arith.constant 0 : i32
    %c0_i32_0 = arith.constant 0 : i32
    %c0_i32_1 = arith.constant 0 : i32
    return %arg0, %arg1, %c0_i32, %c0_i32_0 : i32, i32, i32, i32
  }
}

</mosaic_0001>

<llo_original>
// kernel: tpu_custom_call.1
$region0: #{tpu_custom_call.1}
  #allocation0 [shape = 'u32[]', space=smem, size = 0x4, offset = 0x4, fixed_abs, tag = 'smem constant byte address 0x4 - core index']
  #allocation1 [shape = 'u32[144,128]{1,0:T(1,128)}', space=vmem, size = 0x12000, scoped, tag = 'internal scratch']
  #allocation2 [shape = 'f32[10,18,128]{2,1,0:T(8,128)}', space=vmem, size = 0x1e000, scoped, tag = 'scratch operand']
  %s0 = inlined_call_operand.vmem [shape: f32[2,24,18,128], index: 0, kind: input, shape index: {}]
  %s1 = inlined_call_operand.vmem [shape: f32[2,24,18,128], index: 1, kind: input, shape index: {}]
  %s2 = inlined_call_operand.vmem [shape: f32[9,128,128], index: 2, kind: input, shape index: {}]
  %s3 = inlined_call_operand.hbm [shape: f32[2,16,16,128], index: 3, kind: output, shape index: {0}]
  %s4 = inlined_call_operand.hbm [shape: f32[2,2,2,128], index: 4, kind: output, shape index: {1}]
  %5 = xla_tuple %s3, %s4
  %s6 = sld [smem:[#allocation0]]
  $region53: #{tpu_custom_call.1} parent=0
    _
  %s8 = ssub.s32 1, %s6
  %s9 = scalar_select 0, %s8, %s6
  $region1: #{tpu_custom_call.1} parent=0
    #allocation3 [shape = 'u8[131072]{0}', space=vmem, size = 0x20000, scoped, tag = 'output window, operand 0']
    #allocation4 [shape = 's32[2]{0}', space=sflag, size = 0x8, scoped, tag = 'scoped memory for tpu_custom_call.1']
    #allocation5 [shape = 'u8[2048]{0}', space=vmem, size = 0x800, scoped, tag = 'output window, operand 1']
    #allocation6 [shape = 's32[2]{0}', space=sflag, size = 0x8, scoped, tag = 'scoped memory for tpu_custom_call.1']
    %10 = vsyncpa [#allocation4], 0
    %s11 = scalar_lea.sflag [#allocation4], 1
    %12 = vsyncpa %s11, 0
    %13 = vsyncpa [#allocation6], 0
    %s14 = scalar_lea.sflag [#allocation6], 1
    %15 = vsyncpa %s14, 0
    loop: start=0, step=1, limit=6
    $region2: #{tpu_custom_call.1} parent=1 // loop_pre_header
      _
    $region3: #{tpu_custom_call.1} parent=1 // loop_header
      %s17 = sphi 0, %s21
      %p18 = scmp.ge.s32.totalorder %s17, 6
      %s24 = sphi 0, %s36
      %s25 = sphi 0, %s32
      %s26 = sphi 0, %s24
      %s27 = sphi 0, %s25
      %s28 = sphi 0, %s26
      %s29 = sphi 0, %s27
      %s41 = sphi 0, %s43
      %s44 = sphi 0, %s41
      %s45 = sphi 0, %s44
      %s61 = sphi 0, %s45
      %s73 = sphi 0, %s75
      %s76 = sphi 0, %s73
      %s77 = sphi 0, %s76
      %s93 = sphi 0, %s77
      %s97 = sphi 0, %s97
      %s99 = sphi 0, %s97
      %s100 = sphi 0, %s99
      %s114 = sphi 0, %s100
      %s122 = sphi 0, %s124
      %s125 = sphi 0, %s122
      %s126 = sphi 0, %s125
      %s142 = sphi 0, %s126
      %s150 = sphi 0, %s152
      %s153 = sphi 0, %s150
      %s154 = sphi 0, %s153
      %s170 = sphi 0, %s154
    $region4: #{tpu_custom_call.1} parent=1 // loop_header_branch
      %20 = sbr.rel (%p18) target = $region8
    $region5: #{tpu_custom_call.1} parent=1 // loop_body
      %s22 = ssub.s32 %s17, 1
      %s23 = ssub.s32 %s17, 2
      %s30 = sadd.s32 1, %s25
      %p31 = scmp.ge.s32.totalorder %s30, 2
      %s32 = scalar_select %p31, 0, %s30
      %s33 = sadd.s32 1, %s24
      %s34 = scalar_select %p31, %s33, %s24
      %p35 = scmp.ge.s32.totalorder %s34, 2
      %s36 = scalar_select %p35, 0, %s34
      %s37 = ssub.s32 %s24, %s36
      %s38 = ssub.s32 %s25, %s32
      %s39 = sor.u32 %s37, %s38
      %p40 = scmp.eq.s32.totalorder %s39, 0
      %s42 = sadd.s32 %s41, 1
      %s43 = scalar_select %p40, %s41, %s42
      %p46 = pneg %p40
      %p47 = scmp.eq.s32.totalorder %s17, 3
      %p48 = por %p46, %p47
      %p49 = scmp.ne.s32.totalorder %s41, %s44
      %p50 = scmp.eq.s32.totalorder %s17, 0
      %p51 = por %p49, %p50
      %p52 = scmp.ne.s32.totalorder %s41, %s44
      %p53 = scmp.eq.s32.totalorder %s22, 3
      %p54 = por %p52, %p53
      %p55 = scmp.ne.s32.totalorder %s44, %s45
      %p56 = scmp.eq.s32.totalorder %s22, 0
      %p57 = por %p55, %p56
      %p58 = scmp.ne.s32.totalorder %s44, %s45
      %p59 = scmp.eq.s32.totalorder %s23, 3
      %p60 = por %p58, %p59
      %p62 = scmp.ne.s32.totalorder %s45, %s61
      %p63 = scmp.eq.s32.totalorder %s23, 0
      %p64 = por %p62, %p63
      %s65 = sadd.s32 %s25, 1
      %s66 = smul.u32 %s65, 4
      %s67 = sadd.s32 %s32, 1
      %s68 = smul.u32 %s67, 4
      %s69 = ssub.s32 %s24, %s36
      %s70 = ssub.s32 %s66, %s68
      %s71 = sor.u32 %s69, %s70
      %p72 = scmp.eq.s32.totalorder %s71, 0
      %s74 = sadd.s32 %s73, 1
      %s75 = scalar_select %p72, %s73, %s74
      %p78 = pneg %p72
      %p79 = scmp.eq.s32.totalorder %s17, 3
      %p80 = por %p78, %p79
      %p81 = scmp.ne.s32.totalorder %s73, %s76
      %p82 = scmp.eq.s32.totalorder %s17, 0
      %p83 = por %p81, %p82
      %p84 = scmp.ne.s32.totalorder %s73, %s76
      %p85 = scmp.eq.s32.totalorder %s22, 3
      %p86 = por %p84, %p85
      %p87 = scmp.ne.s32.totalorder %s76, %s77
      %p88 = scmp.eq.s32.totalorder %s22, 0
      %p89 = por %p87, %p88
      %p90 = scmp.ne.s32.totalorder %s76, %s77
      %p91 = scmp.eq.s32.totalorder %s23, 3
      %p92 = por %p90, %p91
      %p94 = scmp.ne.s32.totalorder %s77, %s93
      %p95 = scmp.eq.s32.totalorder %s23, 0
      %p96 = por %p94, %p95
      %s98 = sadd.s32 %s97, 1
      %p101 = scmp.eq.s32.totalorder %s17, 3
      %p102 = scmp.ne.s32.totalorder %s97, %s99
      %p103 = scmp.eq.s32.totalorder %s17, 0
      %p104 = por %p102, %p103
      %p105 = scmp.ne.s32.totalorder %s97, %s99
      %p106 = scmp.eq.s32.totalorder %s22, 3
      %p107 = por %p105, %p106
      %p108 = scmp.ne.s32.totalorder %s99, %s100
      %p109 = scmp.eq.s32.totalorder %s22, 0
      %p110 = por %p108, %p109
      %p111 = scmp.ne.s32.totalorder %s99, %s100
      %p112 = scmp.eq.s32.totalorder %s23, 3
      %p113 = por %p111, %p112
      %p115 = scmp.ne.s32.totalorder %s100, %s114
      %p116 = scmp.eq.s32.totalorder %s23, 0
      %p117 = por %p115, %p116
      %s118 = ssub.s32 %s24, %s36
      %s119 = ssub.s32 %s25, %s32
      %s120 = sor.u32 %s118, %s119
      %p121 = scmp.eq.s32.totalorder %s120, 0
      %s123 = sadd.s32 %s122, 1
      %s124 = scalar_select %p121, %s122, %s123
      %p127 = pneg %p121
      %p128 = scmp.eq.s32.totalorder %s17, 3
      %p129 = por %p127, %p128
      %p130 = scmp.ne.s32.totalorder %s122, %s125
      %p131 = scmp.eq.s32.totalorder %s17, 0
      %p132 = por %p130, %p131
      %p133 = scmp.ne.s32.totalorder %s122, %s125
      %p134 = scmp.eq.s32.totalorder %s22, 3
      %p135 = por %p133, %p134
      %p136 = scmp.ne.s32.totalorder %s125, %s126
      %p137 = scmp.eq.s32.totalorder %s22, 0
      %p138 = por %p136, %p137
      %p139 = scmp.ne.s32.totalorder %s125, %s126
      %p140 = scmp.eq.s32.totalorder %s23, 3
      %p141 = por %p139, %p140
      %p143 = scmp.ne.s32.totalorder %s126, %s142
      %p144 = scmp.eq.s32.totalorder %s23, 0
      %p145 = por %p143, %p144
      %s146 = ssub.s32 %s24, %s36
      %s147 = ssub.s32 %s25, %s32
      %s148 = sor.u32 %s146, %s147
      %p149 = scmp.eq.s32.totalorder %s148, 0
      %s151 = sadd.s32 %s150, 1
      %s152 = scalar_select %p149, %s150, %s151
      %p155 = pneg %p149
      %p156 = scmp.eq.s32.totalorder %s17, 3
      %p157 = por %p155, %p156
      %p158 = scmp.ne.s32.totalorder %s150, %s153
      %p159 = scmp.eq.s32.totalorder %s17, 0
      %p160 = por %p158, %p159
      %p161 = scmp.ne.s32.totalorder %s150, %s153
      %p162 = scmp.eq.s32.totalorder %s22, 3
      %p163 = por %p161, %p162
      %p164 = scmp.ne.s32.totalorder %s153, %s154
      %p165 = scmp.eq.s32.totalorder %s22, 0
      %p166 = por %p164, %p165
      %p167 = scmp.ne.s32.totalorder %s153, %s154
      %p168 = scmp.eq.s32.totalorder %s23, 3
      %p169 = por %p167, %p168
      %p171 = scmp.ne.s32.totalorder %s154, %s170
      %p172 = scmp.eq.s32.totalorder %s23, 0
      %p173 = por %p171, %p172
      %p174 = scmp.le.s32.totalorder 1, %s17
      %p175 = scmp.lt.s32.totalorder %s17, 5
      %p176 = pnand %p174, %p175
      %p177 = pneg %p176
      // Predicated region
      $region9: #{tpu_custom_call.1} parent=5 // pred_check
        _
      $region10: #{tpu_custom_call.1} parent=5 // pred_check_branch
        %179 = sbr.rel (%p176) target = $region12
      $region11: #{tpu_custom_call.1} parent=5 // pred_region
        %s180 = ssub.s32 %s17, 1
        // Predicated region
        $region13: #{tpu_custom_call.1} parent=11 // pred_check
          %p181 = pneg %p110
        $region14: #{tpu_custom_call.1} parent=11 // pred_check_branch
          %183 = sbr.rel (%p181) target = $region16
        $region15: #{tpu_custom_call.1} parent=11 // pred_region
          _
        $region16: #{tpu_custom_call.1} parent=11 // pred_fallthru
          _
      $region12: #{tpu_custom_call.1} parent=5 // pred_fallthru
        _
      %p184 = scmp.lt.s32.totalorder %s17, 4
      // Predicated region
      $region17: #{tpu_custom_call.1} parent=5 // pred_check
        %p185 = pneg %p184
      $region18: #{tpu_custom_call.1} parent=5 // pred_check_branch
        %187 = sbr.rel (%p185) target = $region20
      $region19: #{tpu_custom_call.1} parent=5 // pred_region
        // Predicated region
        $region21: #{tpu_custom_call.1} parent=19 // pred_check
          %p188 = pneg %p51
        $region22: #{tpu_custom_call.1} parent=19 // pred_check_branch
          %190 = sbr.rel (%p188) target = $region24
        $region23: #{tpu_custom_call.1} parent=19 // pred_region
          %s191 = smul.u32 8, %s25
          %p192 = scmp.lt.s32.totalorder %s24, 1
          %s193 = scalar_select %p192, %s24, 1
          %p194 = scmp.lt.s32.totalorder %s191, 23
          %s195 = scalar_select %p194, %s191, 23
          %s196 = smul.addr %s195, 3
          %s197 = smul.addr %s193, 72
          %s198 = sadd.s32 %s196, %s197
          %s199 = smul.addr %s198, 8
          %s200 = scalar_lea.vmem %s0, %s199
          %s201 = smul.u32 8, %s25
        $region24: #{tpu_custom_call.1} parent=19 // pred_fallthru
          _
        // Predicated region
        $region25: #{tpu_custom_call.1} parent=19 // pred_check
          %p202 = pneg %p83
        $region26: #{tpu_custom_call.1} parent=19 // pred_check_branch
          %204 = sbr.rel (%p202) target = $region28
        $region27: #{tpu_custom_call.1} parent=19 // pred_region
          %s205 = sadd.s32 %s25, 1
          %s206 = smul.u32 %s205, 4
          %s207 = smul.u32 2, %s206
          %p208 = scmp.lt.s32.totalorder %s24, 1
          %s209 = scalar_select %p208, %s24, 1
          %p210 = scmp.lt.s32.totalorder %s207, 23
          %s211 = scalar_select %p210, %s207, 23
          %s212 = smul.addr %s211, 3
          %s213 = smul.addr %s209, 72
          %s214 = sadd.s32 %s212, %s213
          %s215 = smul.addr %s214, 8
          %s216 = scalar_lea.vmem %s1, %s215
          %s217 = sadd.s32 %s25, 1
          %s218 = smul.u32 %s217, 4
          %s219 = smul.u32 2, %s218
        $region28: #{tpu_custom_call.1} parent=19 // pred_fallthru
          _
      $region20: #{tpu_custom_call.1} parent=5 // pred_fallthru
        _
      %p220 = scmp.le.s32.totalorder 1, %s17
      %p221 = scmp.lt.s32.totalorder %s17, 5
      %p222 = pnand %p220, %p221
      %p223 = pneg %p222
      // Predicated region
      $region29: #{tpu_custom_call.1} parent=5 // pred_check
        _
      $region30: #{tpu_custom_call.1} parent=5 // pred_check_branch
        %225 = sbr.rel (%p222) target = $region32
      $region31: #{tpu_custom_call.1} parent=5 // pred_region
        %s226 = ssub.s32 %s17, 1
        %s227 = smul.u32 8, %s27
        %p228 = scmp.lt.s32.totalorder %s26, 1
        %s229 = scalar_select %p228, %s26, 1
        %p230 = scmp.lt.s32.totalorder %s227, 23
        %s231 = scalar_select %p230, %s227, 23
        %s232 = smul.addr %s231, 3
        %s233 = smul.addr %s229, 72
        %s234 = sadd.s32 %s232, %s233
        %s235 = smul.addr %s234, 8
        %s236 = scalar_lea.vmem %s0, %s235
        %p237 = pneg %p57
        %p238 = pneg %p54
        %s239 = sadd.s32 %s27, 1
        %s240 = smul.u32 %s239, 4
        %s241 = smul.u32 2, %s240
        %p242 = scmp.lt.s32.totalorder %s26, 1
        %s243 = scalar_select %p242, %s26, 1
        %p244 = scmp.lt.s32.totalorder %s241, 23
        %s245 = scalar_select %p244, %s241, 23
        %s246 = smul.addr %s245, 3
        %s247 = smul.addr %s243, 72
        %s248 = sadd.s32 %s246, %s247
        %s249 = smul.addr %s248, 8
        %s250 = scalar_lea.vmem %s1, %s249
        %p251 = pneg %p89
        %p252 = pneg %p86
        %p253 = pneg %p110
        %p254 = pneg %p107
        %p255 = pneg %p138
        %p256 = pneg %p135
        %s257 = sand.u32 %s125, 1
        %s258 = scalar_lea.sflag [#allocation4], %s257
        %s259 = sand.u32 %s125, 1
        %s260 = smul.addr %s259, 128
        %s261 = scalar_lea.vmem [#allocation3], %s260
        %p262 = pneg %p166
        %p263 = pneg %p163
        %s264 = sand.u32 %s153, 1
        %s265 = scalar_lea.sflag [#allocation6], %s264
        %s266 = sand.u32 %s153, 1
        %s267 = smul.addr %s266, 2
        %s268 = scalar_lea.vmem [#allocation5], %s267
        %s269 = smul.u32 8, %s27
        %p270 = scmp.lt.s32.totalorder %s26, 1
        %s271 = scalar_select %p270, %s26, 1
        %p272 = scmp.lt.s32.totalorder %s269, 23
        %s273 = scalar_select %p272, %s269, 23
        %s274 = smul.addr %s273, 3
        %s275 = smul.addr %s271, 72
        %s276 = sadd.s32 %s274, %s275
        %s277 = smul.addr %s276, 8
        %s278 = scalar_lea.vmem %s0, %s277
        %s279 = smul.u32 8, %s27
        %s280 = sadd.s32 %s27, 1
        %s281 = smul.u32 %s280, 4
        %s282 = smul.u32 2, %s281
        %p283 = scmp.lt.s32.totalorder %s26, 1
        %s284 = scalar_select %p283, %s26, 1
        %p285 = scmp.lt.s32.totalorder %s282, 23
        %s286 = scalar_select %p285, %s282, 23
        %s287 = smul.addr %s286, 3
        %s288 = smul.addr %s284, 72
        %s289 = sadd.s32 %s287, %s288
        %s290 = smul.addr %s289, 8
        %s291 = scalar_lea.vmem %s1, %s290
        %s292 = sadd.s32 %s27, 1
        %s293 = smul.u32 %s292, 4
        %s294 = smul.u32 2, %s293
        %s295 = smul.u32 8, %s27
        %v296 = vld [vmem:[%s278] sm:$0xff]
        %v297 = vld [vmem:[%s278 + $0x8] sm:$0xff]
        %v298 = vld [vmem:[%s278 + $0x10] sm:$0x3]
        %v299 = vld [vmem:[%s278 + $0x18] sm:$0xff]
        %v300 = vld [vmem:[%s278 + $0x20] sm:$0xff]
        %v301 = vld [vmem:[%s278 + $0x28] sm:$0x3]
        %v302 = vld [vmem:[%s278 + $0x30] sm:$0xff]
        %v303 = vld [vmem:[%s278 + $0x38] sm:$0xff]
        %v304 = vld [vmem:[%s278 + $0x40] sm:$0x3]
        %v305 = vld [vmem:[%s278 + $0x48] sm:$0xff]
        %v306 = vld [vmem:[%s278 + $0x50] sm:$0xff]
        %v307 = vld [vmem:[%s278 + $0x58] sm:$0x3]
        %v308 = vld [vmem:[%s278 + $0x60] sm:$0xff]
        %v309 = vld [vmem:[%s278 + $0x68] sm:$0xff]
        %v310 = vld [vmem:[%s278 + $0x70] sm:$0x3]
        %v311 = vld [vmem:[%s278 + $0x78] sm:$0xff]
        %v312 = vld [vmem:[%s278 + $0x80] sm:$0xff]
        %v313 = vld [vmem:[%s278 + $0x88] sm:$0x3]
        %v314 = vld [vmem:[%s278 + $0x90] sm:$0xff]
        %v315 = vld [vmem:[%s278 + $0x98] sm:$0xff]
        %v316 = vld [vmem:[%s278 + $0xa0] sm:$0x3]
        %v317 = vld [vmem:[%s278 + $0xa8] sm:$0xff]
        %v318 = vld [vmem:[%s278 + $0xb0] sm:$0xff]
        %v319 = vld [vmem:[%s278 + $0xb8] sm:$0x3]
        %320 = vst [vmem:[#allocation2] sm:$0xff] %v296
        %321 = vst [vmem:[#allocation2 + $0x8] sm:$0xff] %v297
        %322 = vst [vmem:[#allocation2 + $0x10] sm:$0x3] %v298
        %323 = vst [vmem:[#allocation2 + $0x18] sm:$0xff] %v299
        %324 = vst [vmem:[#allocation2 + $0x20] sm:$0xff] %v300
        %325 = vst [vmem:[#allocation2 + $0x28] sm:$0x3] %v301
        %326 = vst [vmem:[#allocation2 + $0x30] sm:$0xff] %v302
        %327 = vst [vmem:[#allocation2 + $0x38] sm:$0xff] %v303
        %328 = vst [vmem:[#allocation2 + $0x40] sm:$0x3] %v304
        %329 = vst [vmem:[#allocation2 + $0x48] sm:$0xff] %v305
        %330 = vst [vmem:[#allocation2 + $0x50] sm:$0xff] %v306
        %331 = vst [vmem:[#allocation2 + $0x58] sm:$0x3] %v307
        %332 = vst [vmem:[#allocation2 + $0x60] sm:$0xff] %v308
        %333 = vst [vmem:[#allocation2 + $0x68] sm:$0xff] %v309
        %334 = vst [vmem:[#allocation2 + $0x70] sm:$0x3] %v310
        %335 = vst [vmem:[#allocation2 + $0x78] sm:$0xff] %v311
        %336 = vst [vmem:[#allocation2 + $0x80] sm:$0xff] %v312
        %337 = vst [vmem:[#allocation2 + $0x88] sm:$0x3] %v313
        %338 = vst [vmem:[#allocation2 + $0x90] sm:$0xff] %v314
        %339 = vst [vmem:[#allocation2 + $0x98] sm:$0xff] %v315
        %340 = vst [vmem:[#allocation2 + $0xa0] sm:$0x3] %v316
        %341 = vst [vmem:[#allocation2 + $0xa8] sm:$0xff] %v317
        %342 = vst [vmem:[#allocation2 + $0xb0] sm:$0xff] %v318
        %343 = vst [vmem:[#allocation2 + $0xb8] sm:$0x3] %v319
        %v344 = vld [vmem:[%s291] sm:$0xff]
        %v345 = vld [vmem:[%s291 + $0x8] sm:$0xff]
        %v346 = vld [vmem:[%s291 + $0x10] sm:$0x3]
        %v347 = vld [vmem:[%s291 + $0x18] sm:$0xff]
        %v348 = vld [vmem:[%s291 + $0x20] sm:$0xff]
        %v349 = vld [vmem:[%s291 + $0x28] sm:$0x3]
        %s350 = scalar_lea.vmem [#allocation2], 192
        %351 = vst [vmem:[%s350] sm:$0xff] %v344
        %352 = vst [vmem:[%s350 + $0x8] sm:$0xff] %v345
        %353 = vst [vmem:[%s350 + $0x10] sm:$0x3] %v346
        %354 = vst [vmem:[%s350 + $0x18] sm:$0xff] %v347
        %355 = vst [vmem:[%s350 + $0x20] sm:$0xff] %v348
        %356 = vst [vmem:[%s350 + $0x28] sm:$0x3] %v349
        %v357 = vld [vmem:[#allocation2] sm:$0xff]
        %v358 = vld [vmem:[#allocation2 + $0x8] sm:$0xff]
        %v359 = vld [vmem:[#allocation2 + $0x18] sm:$0xff]
        %v360 = vld [vmem:[#allocation2 + $0x20] sm:$0xff]
        %v361 = vld [vmem:[#allocation2 + $0x30] sm:$0xff]
        %v362 = vld [vmem:[#allocation2 + $0x38] sm:$0xff]
        %v363 = vld [vmem:[#allocation2 + $0x48] sm:$0xff]
        %v364 = vld [vmem:[#allocation2 + $0x50] sm:$0xff]
        %v365 = vld [vmem:[#allocation2 + $0x60] sm:$0xff]
        %v366 = vld [vmem:[#allocation2 + $0x68] sm:$0xff]
        %v367 = vld [vmem:[#allocation2 + $0x78] sm:$0xff]
        %v368 = vld [vmem:[#allocation2 + $0x80] sm:$0xff]
        %v369 = vld [vmem:[#allocation2 + $0x90] sm:$0xff]
        %v370 = vld [vmem:[#allocation2 + $0x98] sm:$0xff]
        %v371 = vld [vmem:[#allocation2 + $0xa8] sm:$0xff]
        %v372 = vld [vmem:[#allocation2 + $0xb0] sm:$0xff]
        %v373 = vld [vmem:[%s2] sm:$0xff]
        %v374 = vld [vmem:[%s2 + $0x8] sm:$0xff]
        %v375 = vld [vmem:[%s2 + $0x10] sm:$0xff]
        %v376 = vld [vmem:[%s2 + $0x18] sm:$0xff]
        %v377 = vld [vmem:[%s2 + $0x20] sm:$0xff]
        %v378 = vld [vmem:[%s2 + $0x28] sm:$0xff]
        %v379 = vld [vmem:[%s2 + $0x30] sm:$0xff]
        %v380 = vld [vmem:[%s2 + $0x38] sm:$0xff]
        %v381 = vld [vmem:[%s2 + $0x40] sm:$0xff]
        %v382 = vld [vmem:[%s2 + $0x48] sm:$0xff]
        %v383 = vld [vmem:[%s2 + $0x50] sm:$0xff]
        %v384 = vld [vmem:[%s2 + $0x58] sm:$0xff]
        %v385 = vld [vmem:[%s2 + $0x60] sm:$0xff]
        %v386 = vld [vmem:[%s2 + $0x68] sm:$0xff]
        %v387 = vld [vmem:[%s2 + $0x70] sm:$0xff]
        %v388 = vld [vmem:[%s2 + $0x78] sm:$0xff]
        %v389 = vld [vmem:[#allocation2 + $0x1] sm:$0xff]
        %v390 = vld [vmem:[#allocation2 + $0x9] sm:$0xff]
        %v391 = vld [vmem:[#allocation2 + $0x19] sm:$0xff]
        %v392 = vld [vmem:[#allocation2 + $0x21] sm:$0xff]
        %v393 = vld [vmem:[#allocation2 + $0x31] sm:$0xff]
        %v394 = vld [vmem:[#allocation2 + $0x39] sm:$0xff]
        %v395 = vld [vmem:[#allocation2 + $0x49] sm:$0xff]
        %v396 = vld [vmem:[#allocation2 + $0x51] sm:$0xff]
        %v397 = vld [vmem:[#allocation2 + $0x61] sm:$0xff]
        %v398 = vld [vmem:[#allocation2 + $0x69] sm:$0xff]
        %v399 = vld [vmem:[#allocation2 + $0x79] sm:$0xff]
        %v400 = vld [vmem:[#allocation2 + $0x81] sm:$0xff]
        %v401 = vld [vmem:[#allocation2 + $0x91] sm:$0xff]
        %v402 = vld [vmem:[#allocation2 + $0x99] sm:$0xff]
        %v403 = vld [vmem:[#allocation2 + $0xa9] sm:$0xff]
        %v404 = vld [vmem:[#allocation2 + $0xb1] sm:$0xff]
        %s405 = scalar_lea.vmem %s2, 128
        %v406 = vld [vmem:[%s405] sm:$0xff]
        %v407 = vld [vmem:[%s405 + $0x8] sm:$0xff]
        %v408 = vld [vmem:[%s405 + $0x10] sm:$0xff]
        %v409 = vld [vmem:[%s405 + $0x18] sm:$0xff]
        %v410 = vld [vmem:[%s405 + $0x20] sm:$0xff]
        %v411 = vld [vmem:[%s405 + $0x28] sm:$0xff]
        %v412 = vld [vmem:[%s405 + $0x30] sm:$0xff]
        %v413 = vld [vmem:[%s405 + $0x38] sm:$0xff]
        %v414 = vld [vmem:[%s405 + $0x40] sm:$0xff]
        %v415 = vld [vmem:[%s405 + $0x48] sm:$0xff]
        %v416 = vld [vmem:[%s405 + $0x50] sm:$0xff]
        %v417 = vld [vmem:[%s405 + $0x58] sm:$0xff]
        %v418 = vld [vmem:[%s405 + $0x60] sm:$0xff]
        %v419 = vld [vmem:[%s405 + $0x68] sm:$0xff]
        %v420 = vld [vmem:[%s405 + $0x70] sm:$0xff]
        %v421 = vld [vmem:[%s405 + $0x78] sm:$0xff]
        %422 = vmatprep.subr.mxu0 0.0
        %423 = vmatpush1.msra.mxu0 %v421
        %424 = vmatprep.subr.mxu0 0.0
        %425 = vmatpush1.msra.mxu0 %v420
        %426 = vmatprep.subr.mxu0 0.0
        %427 = vmatpush1.msra.mxu0 %v419
        %428 = vmatprep.subr.mxu0 0.0
        %429 = vmatpush1.msra.mxu0 %v418
        %430 = vmatprep.subr.mxu0 0.0
        %431 = vmatpush1.msra.mxu0 %v417
        %432 = vmatprep.subr.mxu0 0.0
        %433 = vmatpush1.msra.mxu0 %v416
        %434 = vmatprep.subr.mxu0 0.0
        %435 = vmatpush1.msra.mxu0 %v415
        %436 = vmatprep.subr.mxu0 0.0
        %437 = vmatpush1.msra.mxu0 %v414
        %438 = vmatprep.subr.mxu0 0.0
        %439 = vmatpush1.msra.mxu0 %v413
        %440 = vmatprep.subr.mxu0 0.0
        %441 = vmatpush1.msra.mxu0 %v412
        %442 = vmatprep.subr.mxu0 0.0
        %443 = vmatpush1.msra.mxu0 %v411
        %444 = vmatprep.subr.mxu0 0.0
        %445 = vmatpush1.msra.mxu0 %v410
        %446 = vmatprep.subr.mxu0 0.0
        %447 = vmatpush1.msra.mxu0 %v409
        %448 = vmatprep.subr.mxu0 0.0
        %449 = vmatpush1.msra.mxu0 %v408
        %450 = vmatprep.subr.mxu0 0.0
        %451 = vmatpush1.msra.mxu0 %v407
        %452 = vmatprep.subr.mxu0 0.0
        %453 = vmatpush1.msra.mxu0 %v406
        %454 = vmatprep.subr.mxu0 0.0
        %455 = vmatpush2.msra.mxu0 0.0
        %456 = vmatprep.subr.mxu0 0.0
        %457 = vmatpush2.msra.mxu0 0.0
        %458 = vmatprep.subr.mxu0 0.0
        %459 = vmatpush2.msra.mxu0 0.0
        %460 = vmatprep.subr.mxu0 0.0
        %461 = vmatpush2.msra.mxu0 0.0
        %462 = vmatprep.subr.mxu0 0.0
        %463 = vmatpush2.msra.mxu0 0.0
        %464 = vmatprep.subr.mxu0 0.0
        %465 = vmatpush2.msra.mxu0 0.0
        %466 = vmatprep.subr.mxu0 0.0
        %467 = vmatpush2.msra.mxu0 0.0
        %468 = vmatprep.subr.mxu0 0.0
        %469 = vmatpush2.msra.mxu0 0.0
        %470 = vmatprep.subr.mxu0 0.0
        %471 = vmatpush2.msra.mxu0 0.0
        %472 = vmatprep.subr.mxu0 0.0
        %473 = vmatpush2.msra.mxu0 0.0
        %474 = vmatprep.subr.mxu0 0.0
        %475 = vmatpush2.msra.mxu0 0.0
        %476 = vmatprep.subr.mxu0 0.0
        %477 = vmatpush2.msra.mxu0 0.0
        %478 = vmatprep.subr.mxu0 0.0
        %479 = vmatpush2.msra.mxu0 0.0
        %480 = vmatprep.subr.mxu0 0.0
        %481 = vmatpush2.msra.mxu0 0.0
        %482 = vmatprep.subr.mxu0 0.0
        %483 = vmatpush2.msra.mxu0 0.0
        %484 = vmatprep.subr.mxu0 0.0
        %485 = vmatpush2.msra.mxu0 0.0
        %486 = vmatprep.mubr.f32.mxu0 0.0
        %487 = vmatmul.mubr.f32.gmra.mxu0 %v389
        %v488 = vpop.f32.mrf.mxu0
        %v489 = vadd.f32 0.0, %v488
        %v490 = vpop.f32.mrf.mxu0
        %491 = vmatprep.mubr.f32.mxu0 0.0
        %492 = vmatmul.mubr.f32.gmra.mxu0 %v390
        %v493 = vpop.f32.mrf.mxu0
        %v494 = vadd.f32 0.0, %v493
        %v495 = vpop.f32.mrf.mxu0
        %496 = vmatprep.mubr.f32.mxu0 0.0
        %497 = vmatmul.mubr.f32.gmra.mxu0 %v391
        %v498 = vpop.f32.mrf.mxu0
        %v499 = vadd.f32 0.0, %v498
        %v500 = vpop.f32.mrf.mxu0
        %501 = vmatprep.mubr.f32.mxu0 0.0
        %502 = vmatmul.mubr.f32.gmra.mxu0 %v392
        %v503 = vpop.f32.mrf.mxu0
        %v504 = vadd.f32 0.0, %v503
        %v505 = vpop.f32.mrf.mxu0
        %506 = vmatprep.mubr.f32.mxu0 0.0
        %507 = vmatmul.mubr.f32.gmra.mxu0 %v393
        %v508 = vpop.f32.mrf.mxu0
        %v509 = vadd.f32 0.0, %v508
        %v510 = vpop.f32.mrf.mxu0
        %511 = vmatprep.mubr.f32.mxu0 0.0
        %512 = vmatmul.mubr.f32.gmra.mxu0 %v394
        %v513 = vpop.f32.mrf.mxu0
        %v514 = vadd.f32 0.0, %v513
        %v515 = vpop.f32.mrf.mxu0
        %516 = vmatprep.mubr.f32.mxu0 0.0
        %517 = vmatmul.mubr.f32.gmra.mxu0 %v395
        %v518 = vpop.f32.mrf.mxu0
        %v519 = vadd.f32 0.0, %v518
        %v520 = vpop.f32.mrf.mxu0
        %521 = vmatprep.mubr.f32.mxu0 0.0
        %522 = vmatmul.mubr.f32.gmra.mxu0 %v396
        %v523 = vpop.f32.mrf.mxu0
        %v524 = vadd.f32 0.0, %v523
        %v525 = vpop.f32.mrf.mxu0
        %526 = vmatprep.mubr.f32.mxu0 0.0
        %527 = vmatmul.mubr.f32.gmra.mxu0 %v397
        %v528 = vpop.f32.mrf.mxu0
        %v529 = vadd.f32 0.0, %v528
        %v530 = vpop.f32.mrf.mxu0
        %531 = vmatprep.mubr.f32.mxu0 0.0
        %532 = vmatmul.mubr.f32.gmra.mxu0 %v398
        %v533 = vpop.f32.mrf.mxu0
        %v534 = vadd.f32 0.0, %v533
        %v535 = vpop.f32.mrf.mxu0
        %536 = vmatprep.mubr.f32.mxu0 0.0
        %537 = vmatmul.mubr.f32.gmra.mxu0 %v399
        %v538 = vpop.f32.mrf.mxu0
        %v539 = vadd.f32 0.0, %v538
        %v540 = vpop.f32.mrf.mxu0
        %541 = vmatprep.mubr.f32.mxu0 0.0
        %542 = vmatmul.mubr.f32.gmra.mxu0 %v400
        %v543 = vpop.f32.mrf.mxu0
        %v544 = vadd.f32 0.0, %v543
        %v545 = vpop.f32.mrf.mxu0
        %546 = vmatprep.mubr.f32.mxu0 0.0
        %547 = vmatmul.mubr.f32.gmra.mxu0 %v401
        %v548 = vpop.f32.mrf.mxu0
        %v549 = vadd.f32 0.0, %v548
        %v550 = vpop.f32.mrf.mxu0
        %551 = vmatprep.mubr.f32.mxu0 0.0
        %552 = vmatmul.mubr.f32.gmra.mxu0 %v402
        %v553 = vpop.f32.mrf.mxu0
        %v554 = vadd.f32 0.0, %v553
        %v555 = vpop.f32.mrf.mxu0
        %556 = vmatprep.mubr.f32.mxu0 0.0
        %557 = vmatmul.mubr.f32.gmra.mxu0 %v403
        %v558 = vpop.f32.mrf.mxu0
        %v559 = vadd.f32 0.0, %v558
        %v560 = vpop.f32.mrf.mxu0
        %561 = vmatprep.mubr.f32.mxu0 0.0
        %562 = vmatmul.mubr.f32.gmra.mxu0 %v404
        %v563 = vpop.f32.mrf.mxu0
        %v564 = vadd.f32 0.0, %v563
        %v565 = vpop.f32.mrf.mxu0
        %566 = vdwg.mxu0
        %567 = vmatprep.subr.mxu0 0.0
        %568 = vmatpush1.msra.mxu0 %v388
        %569 = vmatprep.subr.mxu0 0.0
        %570 = vmatpush1.msra.mxu0 %v387
        %571 = vmatprep.subr.mxu0 0.0
        %572 = vmatpush1.msra.mxu0 %v386
        %573 = vmatprep.subr.mxu0 0.0
        %574 = vmatpush1.msra.mxu0 %v385
        %575 = vmatprep.subr.mxu0 0.0
        %576 = vmatpush1.msra.mxu0 %v384
        %577 = vmatprep.subr.mxu0 0.0
        %578 = vmatpush1.msra.mxu0 %v383
        %579 = vmatprep.subr.mxu0 0.0
        %580 = vmatpush1.msra.mxu0 %v382
        %581 = vmatprep.subr.mxu0 0.0
        %582 = vmatpush1.msra.mxu0 %v381
        %583 = vmatprep.subr.mxu0 0.0
        %584 = vmatpush1.msra.mxu0 %v380
        %585 = vmatprep.subr.mxu0 0.0
        %586 = vmatpush1.msra.mxu0 %v379
        %587 = vmatprep.subr.mxu0 0.0
        %588 = vmatpush1.msra.mxu0 %v378
        %589 = vmatprep.subr.mxu0 0.0
        %590 = vmatpush1.msra.mxu0 %v377
        %591 = vmatprep.subr.mxu0 0.0
        %592 = vmatpush1.msra.mxu0 %v376
        %593 = vmatprep.subr.mxu0 0.0
        %594 = vmatpush1.msra.mxu0 %v375
        %595 = vmatprep.subr.mxu0 0.0
        %596 = vmatpush1.msra.mxu0 %v374
        %597 = vmatprep.subr.mxu0 0.0
        %598 = vmatpush1.msra.mxu0 %v373
        %599 = vmatprep.subr.mxu0 0.0
        %600 = vmatpush2.msra.mxu0 0.0
        %601 = vmatprep.subr.mxu0 0.0
        %602 = vmatpush2.msra.mxu0 0.0
        %603 = vmatprep.subr.mxu0 0.0
        %604 = vmatpush2.msra.mxu0 0.0
        %605 = vmatprep.subr.mxu0 0.0
        %606 = vmatpush2.msra.mxu0 0.0
        %607 = vmatprep.subr.mxu0 0.0
        %608 = vmatpush2.msra.mxu0 0.0
        %609 = vmatprep.subr.mxu0 0.0
        %610 = vmatpush2.msra.mxu0 0.0
        %611 = vmatprep.subr.mxu0 0.0
        %612 = vmatpush2.msra.mxu0 0.0
        %613 = vmatprep.subr.mxu0 0.0
        %614 = vmatpush2.msra.mxu0 0.0
        %615 = vmatprep.subr.mxu0 0.0
        %616 = vmatpush2.msra.mxu0 0.0
        %617 = vmatprep.subr.mxu0 0.0
        %618 = vmatpush2.msra.mxu0 0.0
        %619 = vmatprep.subr.mxu0 0.0
        %620 = vmatpush2.msra.mxu0 0.0
        %621 = vmatprep.subr.mxu0 0.0
        %622 = vmatpush2.msra.mxu0 0.0
        %623 = vmatprep.subr.mxu0 0.0
        %624 = vmatpush2.msra.mxu0 0.0
        %625 = vmatprep.subr.mxu0 0.0
        %626 = vmatpush2.msra.mxu0 0.0
        %627 = vmatprep.subr.mxu0 0.0
        %628 = vmatpush2.msra.mxu0 0.0
        %629 = vmatprep.subr.mxu0 0.0
        %630 = vmatpush2.msra.mxu0 0.0
        %631 = vmatprep.mubr.f32.mxu0 0.0
        %632 = vmatmul.mubr.f32.gmra.mxu0 %v357
        %v633 = vpop.f32.mrf.mxu0
        %v634 = vadd.f32 %v489, %v633
        %v635 = vpop.f32.mrf.mxu0
        %636 = vmatprep.mubr.f32.mxu0 0.0
        %637 = vmatmul.mubr.f32.gmra.mxu0 %v358
        %v638 = vpop.f32.mrf.mxu0
        %v639 = vadd.f32 %v494, %v638
        %v640 = vpop.f32.mrf.mxu0
        %641 = vmatprep.mubr.f32.mxu0 0.0
        %642 = vmatmul.mubr.f32.gmra.mxu0 %v359
        %v643 = vpop.f32.mrf.mxu0
        %v644 = vadd.f32 %v499, %v643
        %v645 = vpop.f32.mrf.mxu0
        %646 = vmatprep.mubr.f32.mxu0 0.0
        %647 = vmatmul.mubr.f32.gmra.mxu0 %v360
        %v648 = vpop.f32.mrf.mxu0
        %v649 = vadd.f32 %v504, %v648
        %v650 = vpop.f32.mrf.mxu0
        %651 = vmatprep.mubr.f32.mxu0 0.0
        %652 = vmatmul.mubr.f32.gmra.mxu0 %v361
        %v653 = vpop.f32.mrf.mxu0
        %v654 = vadd.f32 %v509, %v653
        %v655 = vpop.f32.mrf.mxu0
        %656 = vmatprep.mubr.f32.mxu0 0.0
        %657 = vmatmul.mubr.f32.gmra.mxu0 %v362
        %v658 = vpop.f32.mrf.mxu0
        %v659 = vadd.f32 %v514, %v658
        %v660 = vpop.f32.mrf.mxu0
        %661 = vmatprep.mubr.f32.mxu0 0.0
        %662 = vmatmul.mubr.f32.gmra.mxu0 %v363
        %v663 = vpop.f32.mrf.mxu0
        %v664 = vadd.f32 %v519, %v663
        %v665 = vpop.f32.mrf.mxu0
        %666 = vmatprep.mubr.f32.mxu0 0.0
        %667 = vmatmul.mubr.f32.gmra.mxu0 %v364
        %v668 = vpop.f32.mrf.mxu0
        %v669 = vadd.f32 %v524, %v668
        %v670 = vpop.f32.mrf.mxu0
        %671 = vmatprep.mubr.f32.mxu0 0.0
        %672 = vmatmul.mubr.f32.gmra.mxu0 %v365
        %v673 = vpop.f32.mrf.mxu0
        %v674 = vadd.f32 %v529, %v673
        %v675 = vpop.f32.mrf.mxu0
        %676 = vmatprep.mubr.f32.mxu0 0.0
        %677 = vmatmul.mubr.f32.gmra.mxu0 %v366
        %v678 = vpop.f32.mrf.mxu0
        %v679 = vadd.f32 %v534, %v678
        %v680 = vpop.f32.mrf.mxu0
        %681 = vmatprep.mubr.f32.mxu0 0.0
        %682 = vmatmul.mubr.f32.gmra.mxu0 %v367
        %v683 = vpop.f32.mrf.mxu0
        %v684 = vadd.f32 %v539, %v683
        %v685 = vpop.f32.mrf.mxu0
        %686 = vmatprep.mubr.f32.mxu0 0.0
        %687 = vmatmul.mubr.f32.gmra.mxu0 %v368
        %v688 = vpop.f32.mrf.mxu0
        %v689 = vadd.f32 %v544, %v688
        %v690 = vpop.f32.mrf.mxu0
        %691 = vmatprep.mubr.f32.mxu0 0.0
        %692 = vmatmul.mubr.f32.gmra.mxu0 %v369
        %v693 = vpop.f32.mrf.mxu0
        %v694 = vadd.f32 %v549, %v693
        %v695 = vpop.f32.mrf.mxu0
        %696 = vmatprep.mubr.f32.mxu0 0.0
        %697 = vmatmul.mubr.f32.gmra.mxu0 %v370
        %v698 = vpop.f32.mrf.mxu0
        %v699 = vadd.f32 %v554, %v698
        %v700 = vpop.f32.mrf.mxu0
        %701 = vmatprep.mubr.f32.mxu0 0.0
        %702 = vmatmul.mubr.f32.gmra.mxu0 %v371
        %v703 = vpop.f32.mrf.mxu0
        %v704 = vadd.f32 %v559, %v703
        %v705 = vpop.f32.mrf.mxu0
        %706 = vmatprep.mubr.f32.mxu0 0.0
        %707 = vmatmul.mubr.f32.gmra.mxu0 %v372
        %v708 = vpop.f32.mrf.mxu0
        %v709 = vadd.f32 %v564, %v708
        %v710 = vpop.f32.mrf.mxu0
        %711 = vdwg.mxu0
        %v712 = vld [vmem:[#allocation2 + $0x2] sm:$0xff]
        %v713 = vld [vmem:[#allocation2 + $0xa] sm:$0xff]
        %v714 = vld [vmem:[#allocation2 + $0x1a] sm:$0xff]
        %v715 = vld [vmem:[#allocation2 + $0x22] sm:$0xff]
        %v716 = vld [vmem:[#allocation2 + $0x32] sm:$0xff]
        %v717 = vld [vmem:[#allocation2 + $0x3a] sm:$0xff]
        %v718 = vld [vmem:[#allocation2 + $0x4a] sm:$0xff]
        %v719 = vld [vmem:[#allocation2 + $0x52] sm:$0xff]
        %v720 = vld [vmem:[#allocation2 + $0x62] sm:$0xff]
        %v721 = vld [vmem:[#allocation2 + $0x6a] sm:$0xff]
        %v722 = vld [vmem:[#allocation2 + $0x7a] sm:$0xff]
        %v723 = vld [vmem:[#allocation2 + $0x82] sm:$0xff]
        %v724 = vld [vmem:[#allocation2 + $0x92] sm:$0xff]
        %v725 = vld [vmem:[#allocation2 + $0x9a] sm:$0xff]
        %v726 = vld [vmem:[#allocation2 + $0xaa] sm:$0xff]
        %v727 = vld [vmem:[#allocation2 + $0xb2] sm:$0xff]
        %s728 = scalar_lea.vmem %s2, 256
        %v729 = vld [vmem:[%s728] sm:$0xff]
        %v730 = vld [vmem:[%s728 + $0x8] sm:$0xff]
        %v731 = vld [vmem:[%s728 + $0x10] sm:$0xff]
        %v732 = vld [vmem:[%s728 + $0x18] sm:$0xff]
        %v733 = vld [vmem:[%s728 + $0x20] sm:$0xff]
        %v734 = vld [vmem:[%s728 + $0x28] sm:$0xff]
        %v735 = vld [vmem:[%s728 + $0x30] sm:$0xff]
        %v736 = vld [vmem:[%s728 + $0x38] sm:$0xff]
        %v737 = vld [vmem:[%s728 + $0x40] sm:$0xff]
        %v738 = vld [vmem:[%s728 + $0x48] sm:$0xff]
        %v739 = vld [vmem:[%s728 + $0x50] sm:$0xff]
        %v740 = vld [vmem:[%s728 + $0x58] sm:$0xff]
        %v741 = vld [vmem:[%s728 + $0x60] sm:$0xff]
        %v742 = vld [vmem:[%s728 + $0x68] sm:$0xff]
        %v743 = vld [vmem:[%s728 + $0x70] sm:$0xff]
        %v744 = vld [vmem:[%s728 + $0x78] sm:$0xff]
        %745 = vmatprep.subr.mxu0 0.0
        %746 = vmatpush1.msra.mxu0 %v744
        %747 = vmatprep.subr.mxu0 0.0
        %748 = vmatpush1.msra.mxu0 %v743
        %749 = vmatprep.subr.mxu0 0.0
        %750 = vmatpush1.msra.mxu0 %v742
        %751 = vmatprep.subr.mxu0 0.0
        %752 = vmatpush1.msra.mxu0 %v741
        %753 = vmatprep.subr.mxu0 0.0
        %754 = vmatpush1.msra.mxu0 %v740
        %755 = vmatprep.subr.mxu0 0.0
        %756 = vmatpush1.msra.mxu0 %v739
        %757 = vmatprep.subr.mxu0 0.0
        %758 = vmatpush1.msra.mxu0 %v738
        %759 = vmatprep.subr.mxu0 0.0
        %760 = vmatpush1.msra.mxu0 %v737
        %761 = vmatprep.subr.mxu0 0.0
        %762 = vmatpush1.msra.mxu0 %v736
        %763 = vmatprep.subr.mxu0 0.0
        %764 = vmatpush1.msra.mxu0 %v735
        %765 = vmatprep.subr.mxu0 0.0
        %766 = vmatpush1.msra.mxu0 %v734
        %767 = vmatprep.subr.mxu0 0.0
        %768 = vmatpush1.msra.mxu0 %v733
        %769 = vmatprep.subr.mxu0 0.0
        %770 = vmatpush1.msra.mxu0 %v732
        %771 = vmatprep.subr.mxu0 0.0
        %772 = vmatpush1.msra.mxu0 %v731
        %773 = vmatprep.subr.mxu0 0.0
        %774 = vmatpush1.msra.mxu0 %v730
        %775 = vmatprep.subr.mxu0 0.0
        %776 = vmatpush1.msra.mxu0 %v729
        %777 = vmatprep.subr.mxu0 0.0
        %778 = vmatpush2.msra.mxu0 0.0
        %779 = vmatprep.subr.mxu0 0.0
        %780 = vmatpush2.msra.mxu0 0.0
        %781 = vmatprep.subr.mxu0 0.0
        %782 = vmatpush2.msra.mxu0 0.0
        %783 = vmatprep.subr.mxu0 0.0
        %784 = vmatpush2.msra.mxu0 0.0
        %785 = vmatprep.subr.mxu0 0.0
        %786 = vmatpush2.msra.mxu0 0.0
        %787 = vmatprep.subr.mxu0 0.0
        %788 = vmatpush2.msra.mxu0 0.0
        %789 = vmatprep.subr.mxu0 0.0
        %790 = vmatpush2.msra.mxu0 0.0
        %791 = vmatprep.subr.mxu0 0.0
        %792 = vmatpush2.msra.mxu0 0.0
        %793 = vmatprep.subr.mxu0 0.0
        %794 = vmatpush2.msra.mxu0 0.0
        %795 = vmatprep.subr.mxu0 0.0
        %796 = vmatpush2.msra.mxu0 0.0
        %797 = vmatprep.subr.mxu0 0.0
        %798 = vmatpush2.msra.mxu0 0.0
        %799 = vmatprep.subr.mxu0 0.0
        %800 = vmatpush2.msra.mxu0 0.0
        %801 = vmatprep.subr.mxu0 0.0
        %802 = vmatpush2.msra.mxu0 0.0
        %803 = vmatprep.subr.mxu0 0.0
        %804 = vmatpush2.msra.mxu0 0.0
        %805 = vmatprep.subr.mxu0 0.0
        %806 = vmatpush2.msra.mxu0 0.0
        %807 = vmatprep.subr.mxu0 0.0
        %808 = vmatpush2.msra.mxu0 0.0
        %809 = vmatprep.mubr.f32.mxu0 0.0
        %810 = vmatmul.mubr.f32.gmra.mxu0 %v712
        %v811 = vpop.f32.mrf.mxu0
        %v812 = vadd.f32 0.0, %v811
        %v813 = vpop.f32.mrf.mxu0
        %814 = vmatprep.mubr.f32.mxu0 0.0
        %815 = vmatmul.mubr.f32.gmra.mxu0 %v713
        %v816 = vpop.f32.mrf.mxu0
        %v817 = vadd.f32 0.0, %v816
        %v818 = vpop.f32.mrf.mxu0
        %819 = vmatprep.mubr.f32.mxu0 0.0
        %820 = vmatmul.mubr.f32.gmra.mxu0 %v714
        %v821 = vpop.f32.mrf.mxu0
        %v822 = vadd.f32 0.0, %v821
        %v823 = vpop.f32.mrf.mxu0
        %824 = vmatprep.mubr.f32.mxu0 0.0
        %825 = vmatmul.mubr.f32.gmra.mxu0 %v715
        %v826 = vpop.f32.mrf.mxu0
        %v827 = vadd.f32 0.0, %v826
        %v828 = vpop.f32.mrf.mxu0
        %829 = vmatprep.mubr.f32.mxu0 0.0
        %830 = vmatmul.mubr.f32.gmra.mxu0 %v716
        %v831 = vpop.f32.mrf.mxu0
        %v832 = vadd.f32 0.0, %v831
        %v833 = vpop.f32.mrf.mxu0
        %834 = vmatprep.mubr.f32.mxu0 0.0
        %835 = vmatmul.mubr.f32.gmra.mxu0 %v717
        %v836 = vpop.f32.mrf.mxu0
        %v837 = vadd.f32 0.0, %v836
        %v838 = vpop.f32.mrf.mxu0
        %839 = vmatprep.mubr.f32.mxu0 0.0
        %840 = vmatmul.mubr.f32.gmra.mxu0 %v718
        %v841 = vpop.f32.mrf.mxu0
        %v842 = vadd.f32 0.0, %v841
        %v843 = vpop.f32.mrf.mxu0
        %844 = vmatprep.mubr.f32.mxu0 0.0
        %845 = vmatmul.mubr.f32.gmra.mxu0 %v719
        %v846 = vpop.f32.mrf.mxu0
        %v847 = vadd.f32 0.0, %v846
        %v848 = vpop.f32.mrf.mxu0
        %849 = vmatprep.mubr.f32.mxu0 0.0
        %850 = vmatmul.mubr.f32.gmra.mxu0 %v720
        %v851 = vpop.f32.mrf.mxu0
        %v852 = vadd.f32 0.0, %v851
        %v853 = vpop.f32.mrf.mxu0
        %854 = vmatprep.mubr.f32.mxu0 0.0
        %855 = vmatmul.mubr.f32.gmra.mxu0 %v721
        %v856 = vpop.f32.mrf.mxu0
        %v857 = vadd.f32 0.0, %v856
        %v858 = vpop.f32.mrf.mxu0
        %859 = vmatprep.mubr.f32.mxu0 0.0
        %860 = vmatmul.mubr.f32.gmra.mxu0 %v722
        %v861 = vpop.f32.mrf.mxu0
        %v862 = vadd.f32 0.0, %v861
        %v863 = vpop.f32.mrf.mxu0
        %864 = vmatprep.mubr.f32.mxu0 0.0
        %865 = vmatmul.mubr.f32.gmra.mxu0 %v723
        %v866 = vpop.f32.mrf.mxu0
        %v867 = vadd.f32 0.0, %v866
        %v868 = vpop.f32.mrf.mxu0
        %869 = vmatprep.mubr.f32.mxu0 0.0
        %870 = vmatmul.mubr.f32.gmra.mxu0 %v724
        %v871 = vpop.f32.mrf.mxu0
        %v872 = vadd.f32 0.0, %v871
        %v873 = vpop.f32.mrf.mxu0
        %874 = vmatprep.mubr.f32.mxu0 0.0
        %875 = vmatmul.mubr.f32.gmra.mxu0 %v725
        %v876 = vpop.f32.mrf.mxu0
        %v877 = vadd.f32 0.0, %v876
        %v878 = vpop.f32.mrf.mxu0
        %879 = vmatprep.mubr.f32.mxu0 0.0
        %880 = vmatmul.mubr.f32.gmra.mxu0 %v726
        %v881 = vpop.f32.mrf.mxu0
        %v882 = vadd.f32 0.0, %v881
        %v883 = vpop.f32.mrf.mxu0
        %884 = vmatprep.mubr.f32.mxu0 0.0
        %885 = vmatmul.mubr.f32.gmra.mxu0 %v727
        %v886 = vpop.f32.mrf.mxu0
        %v887 = vadd.f32 0.0, %v886
        %v888 = vpop.f32.mrf.mxu0
        %889 = vdwg.mxu0
        %v890 = vadd.f32 %v634, %v812
        %v891 = vadd.f32 %v639, %v817
        %v892 = vadd.f32 %v644, %v822
        %v893 = vadd.f32 %v649, %v827
        %v894 = vadd.f32 %v654, %v832
        %v895 = vadd.f32 %v659, %v837
        %v896 = vadd.f32 %v664, %v842
        %v897 = vadd.f32 %v669, %v847
        %v898 = vadd.f32 %v674, %v852
        %v899 = vadd.f32 %v679, %v857
        %v900 = vadd.f32 %v684, %v862
        %v901 = vadd.f32 %v689, %v867
        %v902 = vadd.f32 %v694, %v872
        %v903 = vadd.f32 %v699, %v877
        %v904 = vadd.f32 %v704, %v882
        %v905 = vadd.f32 %v709, %v887
        %s906 = scalar_lea.vmem [#allocation2], 24
        %v907 = vld [vmem:[%s906] sm:$0xff]
        %v908 = vld [vmem:[%s906 + $0x8] sm:$0xff]
        %v909 = vld [vmem:[%s906 + $0x18] sm:$0xff]
        %v910 = vld [vmem:[%s906 + $0x20] sm:$0xff]
        %v911 = vld [vmem:[%s906 + $0x30] sm:$0xff]
        %v912 = vld [vmem:[%s906 + $0x38] sm:$0xff]
        %v913 = vld [vmem:[%s906 + $0x48] sm:$0xff]
        %v914 = vld [vmem:[%s906 + $0x50] sm:$0xff]
        %v915 = vld [vmem:[%s906 + $0x60] sm:$0xff]
        %v916 = vld [vmem:[%s906 + $0x68] sm:$0xff]
        %v917 = vld [vmem:[%s906 + $0x78] sm:$0xff]
        %v918 = vld [vmem:[%s906 + $0x80] sm:$0xff]
        %v919 = vld [vmem:[%s906 + $0x90] sm:$0xff]
        %v920 = vld [vmem:[%s906 + $0x98] sm:$0xff]
        %v921 = vld [vmem:[%s906 + $0xa8] sm:$0xff]
        %v922 = vld [vmem:[%s906 + $0xb0] sm:$0xff]
        %s923 = scalar_lea.vmem %s2, 384
        %v924 = vld [vmem:[%s923] sm:$0xff]
        %v925 = vld [vmem:[%s923 + $0x8] sm:$0xff]
        %v926 = vld [vmem:[%s923 + $0x10] sm:$0xff]
        %v927 = vld [vmem:[%s923 + $0x18] sm:$0xff]
        %v928 = vld [vmem:[%s923 + $0x20] sm:$0xff]
        %v929 = vld [vmem:[%s923 + $0x28] sm:$0xff]
        %v930 = vld [vmem:[%s923 + $0x30] sm:$0xff]
        %v931 = vld [vmem:[%s923 + $0x38] sm:$0xff]
        %v932 = vld [vmem:[%s923 + $0x40] sm:$0xff]
        %v933 = vld [vmem:[%s923 + $0x48] sm:$0xff]
        %v934 = vld [vmem:[%s923 + $0x50] sm:$0xff]
        %v935 = vld [vmem:[%s923 + $0x58] sm:$0xff]
        %v936 = vld [vmem:[%s923 + $0x60] sm:$0xff]
        %v937 = vld [vmem:[%s923 + $0x68] sm:$0xff]
        %v938 = vld [vmem:[%s923 + $0x70] sm:$0xff]
        %v939 = vld [vmem:[%s923 + $0x78] sm:$0xff]
        %940 = vmatprep.subr.mxu0 0.0
        %941 = vmatpush1.msra.mxu0 %v939
        %942 = vmatprep.subr.mxu0 0.0
        %943 = vmatpush1.msra.mxu0 %v938
        %944 = vmatprep.subr.mxu0 0.0
        %945 = vmatpush1.msra.mxu0 %v937
        %946 = vmatprep.subr.mxu0 0.0
        %947 = vmatpush1.msra.mxu0 %v936
        %948 = vmatprep.subr.mxu0 0.0
        %949 = vmatpush1.msra.mxu0 %v935
        %950 = vmatprep.subr.mxu0 0.0
        %951 = vmatpush1.msra.mxu0 %v934
        %952 = vmatprep.subr.mxu0 0.0
        %953 = vmatpush1.msra.mxu0 %v933
        %954 = vmatprep.subr.mxu0 0.0
        %955 = vmatpush1.msra.mxu0 %v932
        %956 = vmatprep.subr.mxu0 0.0
        %957 = vmatpush1.msra.mxu0 %v931
        %958 = vmatprep.subr.mxu0 0.0
        %959 = vmatpush1.msra.mxu0 %v930
        %960 = vmatprep.subr.mxu0 0.0
        %961 = vmatpush1.msra.mxu0 %v929
        %962 = vmatprep.subr.mxu0 0.0
        %963 = vmatpush1.msra.mxu0 %v928
        %964 = vmatprep.subr.mxu0 0.0
        %965 = vmatpush1.msra.mxu0 %v927
        %966 = vmatprep.subr.mxu0 0.0
        %967 = vmatpush1.msra.mxu0 %v926
        %968 = vmatprep.subr.mxu0 0.0
        %969 = vmatpush1.msra.mxu0 %v925
        %970 = vmatprep.subr.mxu0 0.0
        %971 = vmatpush1.msra.mxu0 %v924
        %972 = vmatprep.subr.mxu0 0.0
        %973 = vmatpush2.msra.mxu0 0.0
        %974 = vmatprep.subr.mxu0 0.0
        %975 = vmatpush2.msra.mxu0 0.0
        %976 = vmatprep.subr.mxu0 0.0
        %977 = vmatpush2.msra.mxu0 0.0
        %978 = vmatprep.subr.mxu0 0.0
        %979 = vmatpush2.msra.mxu0 0.0
        %980 = vmatprep.subr.mxu0 0.0
        %981 = vmatpush2.msra.mxu0 0.0
        %982 = vmatprep.subr.mxu0 0.0
        %983 = vmatpush2.msra.mxu0 0.0
        %984 = vmatprep.subr.mxu0 0.0
        %985 = vmatpush2.msra.mxu0 0.0
        %986 = vmatprep.subr.mxu0 0.0
        %987 = vmatpush2.msra.mxu0 0.0
        %988 = vmatprep.subr.mxu0 0.0
        %989 = vmatpush2.msra.mxu0 0.0
        %990 = vmatprep.subr.mxu0 0.0
        %991 = vmatpush2.msra.mxu0 0.0
        %992 = vmatprep.subr.mxu0 0.0
        %993 = vmatpush2.msra.mxu0 0.0
        %994 = vmatprep.subr.mxu0 0.0
        %995 = vmatpush2.msra.mxu0 0.0
        %996 = vmatprep.subr.mxu0 0.0
        %997 = vmatpush2.msra.mxu0 0.0
        %998 = vmatprep.subr.mxu0 0.0
        %999 = vmatpush2.msra.mxu0 0.0
        %1000 = vmatprep.subr.mxu0 0.0
        %1001 = vmatpush2.msra.mxu0 0.0
        %1002 = vmatprep.subr.mxu0 0.0
        %1003 = vmatpush2.msra.mxu0 0.0
        %1004 = vmatprep.mubr.f32.mxu0 0.0
        %1005 = vmatmul.mubr.f32.gmra.mxu0 %v907
        %v1006 = vpop.f32.mrf.mxu0
        %v1007 = vadd.f32 0.0, %v1006
        %v1008 = vpop.f32.mrf.mxu0
        %1009 = vmatprep.mubr.f32.mxu0 0.0
        %1010 = vmatmul.mubr.f32.gmra.mxu0 %v908
        %v1011 = vpop.f32.mrf.mxu0
        %v1012 = vadd.f32 0.0, %v1011
        %v1013 = vpop.f32.mrf.mxu0
        %1014 = vmatprep.mubr.f32.mxu0 0.0
        %1015 = vmatmul.mubr.f32.gmra.mxu0 %v909
        %v1016 = vpop.f32.mrf.mxu0
        %v1017 = vadd.f32 0.0, %v1016
        %v1018 = vpop.f32.mrf.mxu0
        %1019 = vmatprep.mubr.f32.mxu0 0.0
        %1020 = vmatmul.mubr.f32.gmra.mxu0 %v910
        %v1021 = vpop.f32.mrf.mxu0
        %v1022 = vadd.f32 0.0, %v1021
        %v1023 = vpop.f32.mrf.mxu0
        %1024 = vmatprep.mubr.f32.mxu0 0.0
        %1025 = vmatmul.mubr.f32.gmra.mxu0 %v911
        %v1026 = vpop.f32.mrf.mxu0
        %v1027 = vadd.f32 0.0, %v1026
        %v1028 = vpop.f32.mrf.mxu0
        %1029 = vmatprep.mubr.f32.mxu0 0.0
        %1030 = vmatmul.mubr.f32.gmra.mxu0 %v912
        %v1031 = vpop.f32.mrf.mxu0
        %v1032 = vadd.f32 0.0, %v1031
        %v1033 = vpop.f32.mrf.mxu0
        %1034 = vmatprep.mubr.f32.mxu0 0.0
        %1035 = vmatmul.mubr.f32.gmra.mxu0 %v913
        %v1036 = vpop.f32.mrf.mxu0
        %v1037 = vadd.f32 0.0, %v1036
        %v1038 = vpop.f32.mrf.mxu0
        %1039 = vmatprep.mubr.f32.mxu0 0.0
        %1040 = vmatmul.mubr.f32.gmra.mxu0 %v914
        %v1041 = vpop.f32.mrf.mxu0
        %v1042 = vadd.f32 0.0, %v1041
        %v1043 = vpop.f32.mrf.mxu0
        %1044 = vmatprep.mubr.f32.mxu0 0.0
        %1045 = vmatmul.mubr.f32.gmra.mxu0 %v915
        %v1046 = vpop.f32.mrf.mxu0
        %v1047 = vadd.f32 0.0, %v1046
        %v1048 = vpop.f32.mrf.mxu0
        %1049 = vmatprep.mubr.f32.mxu0 0.0
        %1050 = vmatmul.mubr.f32.gmra.mxu0 %v916
        %v1051 = vpop.f32.mrf.mxu0
        %v1052 = vadd.f32 0.0, %v1051
        %v1053 = vpop.f32.mrf.mxu0
        %1054 = vmatprep.mubr.f32.mxu0 0.0
        %1055 = vmatmul.mubr.f32.gmra.mxu0 %v917
        %v1056 = vpop.f32.mrf.mxu0
        %v1057 = vadd.f32 0.0, %v1056
        %v1058 = vpop.f32.mrf.mxu0
        %1059 = vmatprep.mubr.f32.mxu0 0.0
        %1060 = vmatmul.mubr.f32.gmra.mxu0 %v918
        %v1061 = vpop.f32.mrf.mxu0
        %v1062 = vadd.f32 0.0, %v1061
        %v1063 = vpop.f32.mrf.mxu0
        %1064 = vmatprep.mubr.f32.mxu0 0.0
        %1065 = vmatmul.mubr.f32.gmra.mxu0 %v919
        %v1066 = vpop.f32.mrf.mxu0
        %v1067 = vadd.f32 0.0, %v1066
        %v1068 = vpop.f32.mrf.mxu0
        %1069 = vmatprep.mubr.f32.mxu0 0.0
        %1070 = vmatmul.mubr.f32.gmra.mxu0 %v920
        %v1071 = vpop.f32.mrf.mxu0
        %v1072 = vadd.f32 0.0, %v1071
        %v1073 = vpop.f32.mrf.mxu0
        %1074 = vmatprep.mubr.f32.mxu0 0.0
        %1075 = vmatmul.mubr.f32.gmra.mxu0 %v921
        %v1076 = vpop.f32.mrf.mxu0
        %v1077 = vadd.f32 0.0, %v1076
        %v1078 = vpop.f32.mrf.mxu0
        %1079 = vmatprep.mubr.f32.mxu0 0.0
        %1080 = vmatmul.mubr.f32.gmra.mxu0 %v922
        %v1081 = vpop.f32.mrf.mxu0
        %v1082 = vadd.f32 0.0, %v1081
        %v1083 = vpop.f32.mrf.mxu0
        %1084 = vdwg.mxu0
        %v1085 = vadd.f32 %v890, %v1007
        %v1086 = vadd.f32 %v891, %v1012
        %v1087 = vadd.f32 %v892, %v1017
        %v1088 = vadd.f32 %v893, %v1022
        %v1089 = vadd.f32 %v894, %v1027
        %v1090 = vadd.f32 %v895, %v1032
        %v1091 = vadd.f32 %v896, %v1037
        %v1092 = vadd.f32 %v897, %v1042
        %v1093 = vadd.f32 %v898, %v1047
        %v1094 = vadd.f32 %v899, %v1052
        %v1095 = vadd.f32 %v900, %v1057
        %v1096 = vadd.f32 %v901, %v1062
        %v1097 = vadd.f32 %v902, %v1067
        %v1098 = vadd.f32 %v903, %v1072
        %v1099 = vadd.f32 %v904, %v1077
        %v1100 = vadd.f32 %v905, %v1082
        %v1101 = vld [vmem:[%s906 + $0x1] sm:$0xff]
        %v1102 = vld [vmem:[%s906 + $0x9] sm:$0xff]
        %v1103 = vld [vmem:[%s906 + $0x19] sm:$0xff]
        %v1104 = vld [vmem:[%s906 + $0x21] sm:$0xff]
        %v1105 = vld [vmem:[%s906 + $0x31] sm:$0xff]
        %v1106 = vld [vmem:[%s906 + $0x39] sm:$0xff]
        %v1107 = vld [vmem:[%s906 + $0x49] sm:$0xff]
        %v1108 = vld [vmem:[%s906 + $0x51] sm:$0xff]
        %v1109 = vld [vmem:[%s906 + $0x61] sm:$0xff]
        %v1110 = vld [vmem:[%s906 + $0x69] sm:$0xff]
        %v1111 = vld [vmem:[%s906 + $0x79] sm:$0xff]
        %v1112 = vld [vmem:[%s906 + $0x81] sm:$0xff]
        %v1113 = vld [vmem:[%s906 + $0x91] sm:$0xff]
        %v1114 = vld [vmem:[%s906 + $0x99] sm:$0xff]
        %v1115 = vld [vmem:[%s906 + $0xa9] sm:$0xff]
        %v1116 = vld [vmem:[%s906 + $0xb1] sm:$0xff]
        %s1117 = scalar_lea.vmem %s2, 512
        %v1118 = vld [vmem:[%s1117] sm:$0xff]
        %v1119 = vld [vmem:[%s1117 + $0x8] sm:$0xff]
        %v1120 = vld [vmem:[%s1117 + $0x10] sm:$0xff]
        %v1121 = vld [vmem:[%s1117 + $0x18] sm:$0xff]
        %v1122 = vld [vmem:[%s1117 + $0x20] sm:$0xff]
        %v1123 = vld [vmem:[%s1117 + $0x28] sm:$0xff]
        %v1124 = vld [vmem:[%s1117 + $0x30] sm:$0xff]
        %v1125 = vld [vmem:[%s1117 + $0x38] sm:$0xff]
        %v1126 = vld [vmem:[%s1117 + $0x40] sm:$0xff]
        %v1127 = vld [vmem:[%s1117 + $0x48] sm:$0xff]
        %v1128 = vld [vmem:[%s1117 + $0x50] sm:$0xff]
        %v1129 = vld [vmem:[%s1117 + $0x58] sm:$0xff]
        %v1130 = vld [vmem:[%s1117 + $0x60] sm:$0xff]
        %v1131 = vld [vmem:[%s1117 + $0x68] sm:$0xff]
        %v1132 = vld [vmem:[%s1117 + $0x70] sm:$0xff]
        %v1133 = vld [vmem:[%s1117 + $0x78] sm:$0xff]
        %1134 = vmatprep.subr.mxu0 0.0
        %1135 = vmatpush1.msra.mxu0 %v1133
        %1136 = vmatprep.subr.mxu0 0.0
        %1137 = vmatpush1.msra.mxu0 %v1132
        %1138 = vmatprep.subr.mxu0 0.0
        %1139 = vmatpush1.msra.mxu0 %v1131
        %1140 = vmatprep.subr.mxu0 0.0
        %1141 = vmatpush1.msra.mxu0 %v1130
        %1142 = vmatprep.subr.mxu0 0.0
        %1143 = vmatpush1.msra.mxu0 %v1129
        %1144 = vmatprep.subr.mxu0 0.0
        %1145 = vmatpush1.msra.mxu0 %v1128
        %1146 = vmatprep.subr.mxu0 0.0
        %1147 = vmatpush1.msra.mxu0 %v1127
        %1148 = vmatprep.subr.mxu0 0.0
        %1149 = vmatpush1.msra.mxu0 %v1126
        %1150 = vmatprep.subr.mxu0 0.0
        %1151 = vmatpush1.msra.mxu0 %v1125
        %1152 = vmatprep.subr.mxu0 0.0
        %1153 = vmatpush1.msra.mxu0 %v1124
        %1154 = vmatprep.subr.mxu0 0.0
        %1155 = vmatpush1.msra.mxu0 %v1123
        %1156 = vmatprep.subr.mxu0 0.0
        %1157 = vmatpush1.msra.mxu0 %v1122
        %1158 = vmatprep.subr.mxu0 0.0
        %1159 = vmatpush1.msra.mxu0 %v1121
        %1160 = vmatprep.subr.mxu0 0.0
        %1161 = vmatpush1.msra.mxu0 %v1120
        %1162 = vmatprep.subr.mxu0 0.0
        %1163 = vmatpush1.msra.mxu0 %v1119
        %1164 = vmatprep.subr.mxu0 0.0
        %1165 = vmatpush1.msra.mxu0 %v1118
        %1166 = vmatprep.subr.mxu0 0.0
        %1167 = vmatpush2.msra.mxu0 0.0
        %1168 = vmatprep.subr.mxu0 0.0
        %1169 = vmatpush2.msra.mxu0 0.0
        %1170 = vmatprep.subr.mxu0 0.0
        %1171 = vmatpush2.msra.mxu0 0.0
        %1172 = vmatprep.subr.mxu0 0.0
        %1173 = vmatpush2.msra.mxu0 0.0
        %1174 = vmatprep.subr.mxu0 0.0
        %1175 = vmatpush2.msra.mxu0 0.0
        %1176 = vmatprep.subr.mxu0 0.0
        %1177 = vmatpush2.msra.mxu0 0.0
        %1178 = vmatprep.subr.mxu0 0.0
        %1179 = vmatpush2.msra.mxu0 0.0
        %1180 = vmatprep.subr.mxu0 0.0
        %1181 = vmatpush2.msra.mxu0 0.0
        %1182 = vmatprep.subr.mxu0 0.0
        %1183 = vmatpush2.msra.mxu0 0.0
        %1184 = vmatprep.subr.mxu0 0.0
        %1185 = vmatpush2.msra.mxu0 0.0
        %1186 = vmatprep.subr.mxu0 0.0
        %1187 = vmatpush2.msra.mxu0 0.0
        %1188 = vmatprep.subr.mxu0 0.0
        %1189 = vmatpush2.msra.mxu0 0.0
        %1190 = vmatprep.subr.mxu0 0.0
        %1191 = vmatpush2.msra.mxu0 0.0
        %1192 = vmatprep.subr.mxu0 0.0
        %1193 = vmatpush2.msra.mxu0 0.0
        %1194 = vmatprep.subr.mxu0 0.0
        %1195 = vmatpush2.msra.mxu0 0.0
        %1196 = vmatprep.subr.mxu0 0.0
        %1197 = vmatpush2.msra.mxu0 0.0
        %1198 = vmatprep.mubr.f32.mxu0 0.0
        %1199 = vmatmul.mubr.f32.gmra.mxu0 %v1101
        %v1200 = vpop.f32.mrf.mxu0
        %v1201 = vadd.f32 0.0, %v1200
        %v1202 = vpop.f32.mrf.mxu0
        %1203 = vmatprep.mubr.f32.mxu0 0.0
        %1204 = vmatmul.mubr.f32.gmra.mxu0 %v1102
        %v1205 = vpop.f32.mrf.mxu0
        %v1206 = vadd.f32 0.0, %v1205
        %v1207 = vpop.f32.mrf.mxu0
        %1208 = vmatprep.mubr.f32.mxu0 0.0
        %1209 = vmatmul.mubr.f32.gmra.mxu0 %v1103
        %v1210 = vpop.f32.mrf.mxu0
        %v1211 = vadd.f32 0.0, %v1210
        %v1212 = vpop.f32.mrf.mxu0
        %1213 = vmatprep.mubr.f32.mxu0 0.0
        %1214 = vmatmul.mubr.f32.gmra.mxu0 %v1104
        %v1215 = vpop.f32.mrf.mxu0
        %v1216 = vadd.f32 0.0, %v1215
        %v1217 = vpop.f32.mrf.mxu0
        %1218 = vmatprep.mubr.f32.mxu0 0.0
        %1219 = vmatmul.mubr.f32.gmra.mxu0 %v1105
        %v1220 = vpop.f32.mrf.mxu0
        %v1221 = vadd.f32 0.0, %v1220
        %v1222 = vpop.f32.mrf.mxu0
        %1223 = vmatprep.mubr.f32.mxu0 0.0
        %1224 = vmatmul.mubr.f32.gmra.mxu0 %v1106
        %v1225 = vpop.f32.mrf.mxu0
        %v1226 = vadd.f32 0.0, %v1225
        %v1227 = vpop.f32.mrf.mxu0
        %1228 = vmatprep.mubr.f32.mxu0 0.0
        %1229 = vmatmul.mubr.f32.gmra.mxu0 %v1107
        %v1230 = vpop.f32.mrf.mxu0
        %v1231 = vadd.f32 0.0, %v1230
        %v1232 = vpop.f32.mrf.mxu0
        %1233 = vmatprep.mubr.f32.mxu0 0.0
        %1234 = vmatmul.mubr.f32.gmra.mxu0 %v1108
        %v1235 = vpop.f32.mrf.mxu0
        %v1236 = vadd.f32 0.0, %v1235
        %v1237 = vpop.f32.mrf.mxu0
        %1238 = vmatprep.mubr.f32.mxu0 0.0
        %1239 = vmatmul.mubr.f32.gmra.mxu0 %v1109
        %v1240 = vpop.f32.mrf.mxu0
        %v1241 = vadd.f32 0.0, %v1240
        %v1242 = vpop.f32.mrf.mxu0
        %1243 = vmatprep.mubr.f32.mxu0 0.0
        %1244 = vmatmul.mubr.f32.gmra.mxu0 %v1110
        %v1245 = vpop.f32.mrf.mxu0
        %v1246 = vadd.f32 0.0, %v1245
        %v1247 = vpop.f32.mrf.mxu0
        %1248 = vmatprep.mubr.f32.mxu0 0.0
        %1249 = vmatmul.mubr.f32.gmra.mxu0 %v1111
        %v1250 = vpop.f32.mrf.mxu0
        %v1251 = vadd.f32 0.0, %v1250
        %v1252 = vpop.f32.mrf.mxu0
        %1253 = vmatprep.mubr.f32.mxu0 0.0
        %1254 = vmatmul.mubr.f32.gmra.mxu0 %v1112
        %v1255 = vpop.f32.mrf.mxu0
        %v1256 = vadd.f32 0.0, %v1255
        %v1257 = vpop.f32.mrf.mxu0
        %1258 = vmatprep.mubr.f32.mxu0 0.0
        %1259 = vmatmul.mubr.f32.gmra.mxu0 %v1113
        %v1260 = vpop.f32.mrf.mxu0
        %v1261 = vadd.f32 0.0, %v1260
        %v1262 = vpop.f32.mrf.mxu0
        %1263 = vmatprep.mubr.f32.mxu0 0.0
        %1264 = vmatmul.mubr.f32.gmra.mxu0 %v1114
        %v1265 = vpop.f32.mrf.mxu0
        %v1266 = vadd.f32 0.0, %v1265
        %v1267 = vpop.f32.mrf.mxu0
        %1268 = vmatprep.mubr.f32.mxu0 0.0
        %1269 = vmatmul.mubr.f32.gmra.mxu0 %v1115
        %v1270 = vpop.f32.mrf.mxu0
        %v1271 = vadd.f32 0.0, %v1270
        %v1272 = vpop.f32.mrf.mxu0
        %1273 = vmatprep.mubr.f32.mxu0 0.0
        %1274 = vmatmul.mubr.f32.gmra.mxu0 %v1116
        %v1275 = vpop.f32.mrf.mxu0
        %v1276 = vadd.f32 0.0, %v1275
        %v1277 = vpop.f32.mrf.mxu0
        %1278 = vdwg.mxu0
        %v1279 = vadd.f32 %v1085, %v1201
        %v1280 = vadd.f32 %v1086, %v1206
        %v1281 = vadd.f32 %v1087, %v1211
        %v1282 = vadd.f32 %v1088, %v1216
        %v1283 = vadd.f32 %v1089, %v1221
        %v1284 = vadd.f32 %v1090, %v1226
        %v1285 = vadd.f32 %v1091, %v1231
        %v1286 = vadd.f32 %v1092, %v1236
        %v1287 = vadd.f32 %v1093, %v1241
        %v1288 = vadd.f32 %v1094, %v1246
        %v1289 = vadd.f32 %v1095, %v1251
        %v1290 = vadd.f32 %v1096, %v1256
        %v1291 = vadd.f32 %v1097, %v1261
        %v1292 = vadd.f32 %v1098, %v1266
        %v1293 = vadd.f32 %v1099, %v1271
        %v1294 = vadd.f32 %v1100, %v1276
        %v1295 = vld [vmem:[%s906 + $0x2] sm:$0xff]
        %v1296 = vld [vmem:[%s906 + $0xa] sm:$0xff]
        %v1297 = vld [vmem:[%s906 + $0x1a] sm:$0xff]
        %v1298 = vld [vmem:[%s906 + $0x22] sm:$0xff]
        %v1299 = vld [vmem:[%s906 + $0x32] sm:$0xff]
        %v1300 = vld [vmem:[%s906 + $0x3a] sm:$0xff]
        %v1301 = vld [vmem:[%s906 + $0x4a] sm:$0xff]
        %v1302 = vld [vmem:[%s906 + $0x52] sm:$0xff]
        %v1303 = vld [vmem:[%s906 + $0x62] sm:$0xff]
        %v1304 = vld [vmem:[%s906 + $0x6a] sm:$0xff]
        %v1305 = vld [vmem:[%s906 + $0x7a] sm:$0xff]
        %v1306 = vld [vmem:[%s906 + $0x82] sm:$0xff]
        %v1307 = vld [vmem:[%s906 + $0x92] sm:$0xff]
        %v1308 = vld [vmem:[%s906 + $0x9a] sm:$0xff]
        %v1309 = vld [vmem:[%s906 + $0xaa] sm:$0xff]
        %v1310 = vld [vmem:[%s906 + $0xb2] sm:$0xff]
        %s1311 = scalar_lea.vmem %s2, 640
        %v1312 = vld [vmem:[%s1311] sm:$0xff]
        %v1313 = vld [vmem:[%s1311 + $0x8] sm:$0xff]
        %v1314 = vld [vmem:[%s1311 + $0x10] sm:$0xff]
        %v1315 = vld [vmem:[%s1311 + $0x18] sm:$0xff]
        %v1316 = vld [vmem:[%s1311 + $0x20] sm:$0xff]
        %v1317 = vld [vmem:[%s1311 + $0x28] sm:$0xff]
        %v1318 = vld [vmem:[%s1311 + $0x30] sm:$0xff]
        %v1319 = vld [vmem:[%s1311 + $0x38] sm:$0xff]
        %v1320 = vld [vmem:[%s1311 + $0x40] sm:$0xff]
        %v1321 = vld [vmem:[%s1311 + $0x48] sm:$0xff]
        %v1322 = vld [vmem:[%s1311 + $0x50] sm:$0xff]
        %v1323 = vld [vmem:[%s1311 + $0x58] sm:$0xff]
        %v1324 = vld [vmem:[%s1311 + $0x60] sm:$0xff]
        %v1325 = vld [vmem:[%s1311 + $0x68] sm:$0xff]
        %v1326 = vld [vmem:[%s1311 + $0x70] sm:$0xff]
        %v1327 = vld [vmem:[%s1311 + $0x78] sm:$0xff]
        %1328 = vmatprep.subr.mxu0 0.0
        %1329 = vmatpush1.msra.mxu0 %v1327
        %1330 = vmatprep.subr.mxu0 0.0
        %1331 = vmatpush1.msra.mxu0 %v1326
        %1332 = vmatprep.subr.mxu0 0.0
        %1333 = vmatpush1.msra.mxu0 %v1325
        %1334 = vmatprep.subr.mxu0 0.0
        %1335 = vmatpush1.msra.mxu0 %v1324
        %1336 = vmatprep.subr.mxu0 0.0
        %1337 = vmatpush1.msra.mxu0 %v1323
        %1338 = vmatprep.subr.mxu0 0.0
        %1339 = vmatpush1.msra.mxu0 %v1322
        %1340 = vmatprep.subr.mxu0 0.0
        %1341 = vmatpush1.msra.mxu0 %v1321
        %1342 = vmatprep.subr.mxu0 0.0
        %1343 = vmatpush1.msra.mxu0 %v1320
        %1344 = vmatprep.subr.mxu0 0.0
        %1345 = vmatpush1.msra.mxu0 %v1319
        %1346 = vmatprep.subr.mxu0 0.0
        %1347 = vmatpush1.msra.mxu0 %v1318
        %1348 = vmatprep.subr.mxu0 0.0
        %1349 = vmatpush1.msra.mxu0 %v1317
        %1350 = vmatprep.subr.mxu0 0.0
        %1351 = vmatpush1.msra.mxu0 %v1316
        %1352 = vmatprep.subr.mxu0 0.0
        %1353 = vmatpush1.msra.mxu0 %v1315
        %1354 = vmatprep.subr.mxu0 0.0
        %1355 = vmatpush1.msra.mxu0 %v1314
        %1356 = vmatprep.subr.mxu0 0.0
        %1357 = vmatpush1.msra.mxu0 %v1313
        %1358 = vmatprep.subr.mxu0 0.0
        %1359 = vmatpush1.msra.mxu0 %v1312
        %1360 = vmatprep.subr.mxu0 0.0
        %1361 = vmatpush2.msra.mxu0 0.0
        %1362 = vmatprep.subr.mxu0 0.0
        %1363 = vmatpush2.msra.mxu0 0.0
        %1364 = vmatprep.subr.mxu0 0.0
        %1365 = vmatpush2.msra.mxu0 0.0
        %1366 = vmatprep.subr.mxu0 0.0
        %1367 = vmatpush2.msra.mxu0 0.0
        %1368 = vmatprep.subr.mxu0 0.0
        %1369 = vmatpush2.msra.mxu0 0.0
        %1370 = vmatprep.subr.mxu0 0.0
        %1371 = vmatpush2.msra.mxu0 0.0
        %1372 = vmatprep.subr.mxu0 0.0
        %1373 = vmatpush2.msra.mxu0 0.0
        %1374 = vmatprep.subr.mxu0 0.0
        %1375 = vmatpush2.msra.mxu0 0.0
        %1376 = vmatprep.subr.mxu0 0.0
        %1377 = vmatpush2.msra.mxu0 0.0
        %1378 = vmatprep.subr.mxu0 0.0
        %1379 = vmatpush2.msra.mxu0 0.0
        %1380 = vmatprep.subr.mxu0 0.0
        %1381 = vmatpush2.msra.mxu0 0.0
        %1382 = vmatprep.subr.mxu0 0.0
        %1383 = vmatpush2.msra.mxu0 0.0
        %1384 = vmatprep.subr.mxu0 0.0
        %1385 = vmatpush2.msra.mxu0 0.0
        %1386 = vmatprep.subr.mxu0 0.0
        %1387 = vmatpush2.msra.mxu0 0.0
        %1388 = vmatprep.subr.mxu0 0.0
        %1389 = vmatpush2.msra.mxu0 0.0
        %1390 = vmatprep.subr.mxu0 0.0
        %1391 = vmatpush2.msra.mxu0 0.0
        %1392 = vmatprep.mubr.f32.mxu0 0.0
        %1393 = vmatmul.mubr.f32.gmra.mxu0 %v1295
        %v1394 = vpop.f32.mrf.mxu0
        %v1395 = vadd.f32 0.0, %v1394
        %v1396 = vpop.f32.mrf.mxu0
        %1397 = vmatprep.mubr.f32.mxu0 0.0
        %1398 = vmatmul.mubr.f32.gmra.mxu0 %v1296
        %v1399 = vpop.f32.mrf.mxu0
        %v1400 = vadd.f32 0.0, %v1399
        %v1401 = vpop.f32.mrf.mxu0
        %1402 = vmatprep.mubr.f32.mxu0 0.0
        %1403 = vmatmul.mubr.f32.gmra.mxu0 %v1297
        %v1404 = vpop.f32.mrf.mxu0
        %v1405 = vadd.f32 0.0, %v1404
        %v1406 = vpop.f32.mrf.mxu0
        %1407 = vmatprep.mubr.f32.mxu0 0.0
        %1408 = vmatmul.mubr.f32.gmra.mxu0 %v1298
        %v1409 = vpop.f32.mrf.mxu0
        %v1410 = vadd.f32 0.0, %v1409
        %v1411 = vpop.f32.mrf.mxu0
        %1412 = vmatprep.mubr.f32.mxu0 0.0
        %1413 = vmatmul.mubr.f32.gmra.mxu0 %v1299
        %v1414 = vpop.f32.mrf.mxu0
        %v1415 = vadd.f32 0.0, %v1414
        %v1416 = vpop.f32.mrf.mxu0
        %1417 = vmatprep.mubr.f32.mxu0 0.0
        %1418 = vmatmul.mubr.f32.gmra.mxu0 %v1300
        %v1419 = vpop.f32.mrf.mxu0
        %v1420 = vadd.f32 0.0, %v1419
        %v1421 = vpop.f32.mrf.mxu0
        %1422 = vmatprep.mubr.f32.mxu0 0.0
        %1423 = vmatmul.mubr.f32.gmra.mxu0 %v1301
        %v1424 = vpop.f32.mrf.mxu0
        %v1425 = vadd.f32 0.0, %v1424
        %v1426 = vpop.f32.mrf.mxu0
        %1427 = vmatprep.mubr.f32.mxu0 0.0
        %1428 = vmatmul.mubr.f32.gmra.mxu0 %v1302
        %v1429 = vpop.f32.mrf.mxu0
        %v1430 = vadd.f32 0.0, %v1429
        %v1431 = vpop.f32.mrf.mxu0
        %1432 = vmatprep.mubr.f32.mxu0 0.0
        %1433 = vmatmul.mubr.f32.gmra.mxu0 %v1303
        %v1434 = vpop.f32.mrf.mxu0
        %v1435 = vadd.f32 0.0, %v1434
        %v1436 = vpop.f32.mrf.mxu0
        %1437 = vmatprep.mubr.f32.mxu0 0.0
        %1438 = vmatmul.mubr.f32.gmra.mxu0 %v1304
        %v1439 = vpop.f32.mrf.mxu0
        %v1440 = vadd.f32 0.0, %v1439
        %v1441 = vpop.f32.mrf.mxu0
        %1442 = vmatprep.mubr.f32.mxu0 0.0
        %1443 = vmatmul.mubr.f32.gmra.mxu0 %v1305
        %v1444 = vpop.f32.mrf.mxu0
        %v1445 = vadd.f32 0.0, %v1444
        %v1446 = vpop.f32.mrf.mxu0
        %1447 = vmatprep.mubr.f32.mxu0 0.0
        %1448 = vmatmul.mubr.f32.gmra.mxu0 %v1306
        %v1449 = vpop.f32.mrf.mxu0
        %v1450 = vadd.f32 0.0, %v1449
        %v1451 = vpop.f32.mrf.mxu0
        %1452 = vmatprep.mubr.f32.mxu0 0.0
        %1453 = vmatmul.mubr.f32.gmra.mxu0 %v1307
        %v1454 = vpop.f32.mrf.mxu0
        %v1455 = vadd.f32 0.0, %v1454
        %v1456 = vpop.f32.mrf.mxu0
        %1457 = vmatprep.mubr.f32.mxu0 0.0
        %1458 = vmatmul.mubr.f32.gmra.mxu0 %v1308
        %v1459 = vpop.f32.mrf.mxu0
        %v1460 = vadd.f32 0.0, %v1459
        %v1461 = vpop.f32.mrf.mxu0
        %1462 = vmatprep.mubr.f32.mxu0 0.0
        %1463 = vmatmul.mubr.f32.gmra.mxu0 %v1309
        %v1464 = vpop.f32.mrf.mxu0
        %v1465 = vadd.f32 0.0, %v1464
        %v1466 = vpop.f32.mrf.mxu0
        %1467 = vmatprep.mubr.f32.mxu0 0.0
        %1468 = vmatmul.mubr.f32.gmra.mxu0 %v1310
        %v1469 = vpop.f32.mrf.mxu0
        %v1470 = vadd.f32 0.0, %v1469
        %v1471 = vpop.f32.mrf.mxu0
        %1472 = vdwg.mxu0
        %v1473 = vadd.f32 %v1279, %v1395
        %v1474 = vadd.f32 %v1280, %v1400
        %v1475 = vadd.f32 %v1281, %v1405
        %v1476 = vadd.f32 %v1282, %v1410
        %v1477 = vadd.f32 %v1283, %v1415
        %v1478 = vadd.f32 %v1284, %v1420
        %v1479 = vadd.f32 %v1285, %v1425
        %v1480 = vadd.f32 %v1286, %v1430
        %v1481 = vadd.f32 %v1287, %v1435
        %v1482 = vadd.f32 %v1288, %v1440
        %v1483 = vadd.f32 %v1289, %v1445
        %v1484 = vadd.f32 %v1290, %v1450
        %v1485 = vadd.f32 %v1291, %v1455
        %v1486 = vadd.f32 %v1292, %v1460
        %v1487 = vadd.f32 %v1293, %v1465
        %v1488 = vadd.f32 %v1294, %v1470
        %s1489 = scalar_lea.vmem [#allocation2], 48
        %v1490 = vld [vmem:[%s1489] sm:$0xff]
        %v1491 = vld [vmem:[%s1489 + $0x8] sm:$0xff]
        %v1492 = vld [vmem:[%s1489 + $0x18] sm:$0xff]
        %v1493 = vld [vmem:[%s1489 + $0x20] sm:$0xff]
        %v1494 = vld [vmem:[%s1489 + $0x30] sm:$0xff]
        %v1495 = vld [vmem:[%s1489 + $0x38] sm:$0xff]
        %v1496 = vld [vmem:[%s1489 + $0x48] sm:$0xff]
        %v1497 = vld [vmem:[%s1489 + $0x50] sm:$0xff]
        %v1498 = vld [vmem:[%s1489 + $0x60] sm:$0xff]
        %v1499 = vld [vmem:[%s1489 + $0x68] sm:$0xff]
        %v1500 = vld [vmem:[%s1489 + $0x78] sm:$0xff]
        %v1501 = vld [vmem:[%s1489 + $0x80] sm:$0xff]
        %v1502 = vld [vmem:[%s1489 + $0x90] sm:$0xff]
        %v1503 = vld [vmem:[%s1489 + $0x98] sm:$0xff]
        %v1504 = vld [vmem:[%s1489 + $0xa8] sm:$0xff]
        %v1505 = vld [vmem:[%s1489 + $0xb0] sm:$0xff]
        %s1506 = scalar_lea.vmem %s2, 768
        %v1507 = vld [vmem:[%s1506] sm:$0xff]
        %v1508 = vld [vmem:[%s1506 + $0x8] sm:$0xff]
        %v1509 = vld [vmem:[%s1506 + $0x10] sm:$0xff]
        %v1510 = vld [vmem:[%s1506 + $0x18] sm:$0xff]
        %v1511 = vld [vmem:[%s1506 + $0x20] sm:$0xff]
        %v1512 = vld [vmem:[%s1506 + $0x28] sm:$0xff]
        %v1513 = vld [vmem:[%s1506 + $0x30] sm:$0xff]
        %v1514 = vld [vmem:[%s1506 + $0x38] sm:$0xff]
        %v1515 = vld [vmem:[%s1506 + $0x40] sm:$0xff]
        %v1516 = vld [vmem:[%s1506 + $0x48] sm:$0xff]
        %v1517 = vld [vmem:[%s1506 + $0x50] sm:$0xff]
        %v1518 = vld [vmem:[%s1506 + $0x58] sm:$0xff]
        %v1519 = vld [vmem:[%s1506 + $0x60] sm:$0xff]
        %v1520 = vld [vmem:[%s1506 + $0x68] sm:$0xff]
        %v1521 = vld [vmem:[%s1506 + $0x70] sm:$0xff]
        %v1522 = vld [vmem:[%s1506 + $0x78] sm:$0xff]
        %1523 = vmatprep.subr.mxu0 0.0
        %1524 = vmatpush1.msra.mxu0 %v1522
        %1525 = vmatprep.subr.mxu0 0.0
        %1526 = vmatpush1.msra.mxu0 %v1521
        %1527 = vmatprep.subr.mxu0 0.0
        %1528 = vmatpush1.msra.mxu0 %v1520
        %1529 = vmatprep.subr.mxu0 0.0
        %1530 = vmatpush1.msra.mxu0 %v1519
        %1531 = vmatprep.subr.mxu0 0.0
        %1532 = vmatpush1.msra.mxu0 %v1518
        %1533 = vmatprep.subr.mxu0 0.0
        %1534 = vmatpush1.msra.mxu0 %v1517
        %1535 = vmatprep.subr.mxu0 0.0
        %1536 = vmatpush1.msra.mxu0 %v1516
        %1537 = vmatprep.subr.mxu0 0.0
        %1538 = vmatpush1.msra.mxu0 %v1515
        %1539 = vmatprep.subr.mxu0 0.0
        %1540 = vmatpush1.msra.mxu0 %v1514
        %1541 = vmatprep.subr.mxu0 0.0
        %1542 = vmatpush1.msra.mxu0 %v1513
        %1543 = vmatprep.subr.mxu0 0.0
        %1544 = vmatpush1.msra.mxu0 %v1512
        %1545 = vmatprep.subr.mxu0 0.0
        %1546 = vmatpush1.msra.mxu0 %v1511
        %1547 = vmatprep.subr.mxu0 0.0
        %1548 = vmatpush1.msra.mxu0 %v1510
        %1549 = vmatprep.subr.mxu0 0.0
        %1550 = vmatpush1.msra.mxu0 %v1509
        %1551 = vmatprep.subr.mxu0 0.0
        %1552 = vmatpush1.msra.mxu0 %v1508
        %1553 = vmatprep.subr.mxu0 0.0
        %1554 = vmatpush1.msra.mxu0 %v1507
        %1555 = vmatprep.subr.mxu0 0.0
        %1556 = vmatpush2.msra.mxu0 0.0
        %1557 = vmatprep.subr.mxu0 0.0
        %1558 = vmatpush2.msra.mxu0 0.0
        %1559 = vmatprep.subr.mxu0 0.0
        %1560 = vmatpush2.msra.mxu0 0.0
        %1561 = vmatprep.subr.mxu0 0.0
        %1562 = vmatpush2.msra.mxu0 0.0
        %1563 = vmatprep.subr.mxu0 0.0
        %1564 = vmatpush2.msra.mxu0 0.0
        %1565 = vmatprep.subr.mxu0 0.0
        %1566 = vmatpush2.msra.mxu0 0.0
        %1567 = vmatprep.subr.mxu0 0.0
        %1568 = vmatpush2.msra.mxu0 0.0
        %1569 = vmatprep.subr.mxu0 0.0
        %1570 = vmatpush2.msra.mxu0 0.0
        %1571 = vmatprep.subr.mxu0 0.0
        %1572 = vmatpush2.msra.mxu0 0.0
        %1573 = vmatprep.subr.mxu0 0.0
        %1574 = vmatpush2.msra.mxu0 0.0
        %1575 = vmatprep.subr.mxu0 0.0
        %1576 = vmatpush2.msra.mxu0 0.0
        %1577 = vmatprep.subr.mxu0 0.0
        %1578 = vmatpush2.msra.mxu0 0.0
        %1579 = vmatprep.subr.mxu0 0.0
        %1580 = vmatpush2.msra.mxu0 0.0
        %1581 = vmatprep.subr.mxu0 0.0
        %1582 = vmatpush2.msra.mxu0 0.0
        %1583 = vmatprep.subr.mxu0 0.0
        %1584 = vmatpush2.msra.mxu0 0.0
        %1585 = vmatprep.subr.mxu0 0.0
        %1586 = vmatpush2.msra.mxu0 0.0
        %1587 = vmatprep.mubr.f32.mxu0 0.0
        %1588 = vmatmul.mubr.f32.gmra.mxu0 %v1490
        %v1589 = vpop.f32.mrf.mxu0
        %v1590 = vadd.f32 0.0, %v1589
        %v1591 = vpop.f32.mrf.mxu0
        %1592 = vmatprep.mubr.f32.mxu0 0.0
        %1593 = vmatmul.mubr.f32.gmra.mxu0 %v1491
        %v1594 = vpop.f32.mrf.mxu0
        %v1595 = vadd.f32 0.0, %v1594
        %v1596 = vpop.f32.mrf.mxu0
        %1597 = vmatprep.mubr.f32.mxu0 0.0
        %1598 = vmatmul.mubr.f32.gmra.mxu0 %v1492
        %v1599 = vpop.f32.mrf.mxu0
        %v1600 = vadd.f32 0.0, %v1599
        %v1601 = vpop.f32.mrf.mxu0
        %1602 = vmatprep.mubr.f32.mxu0 0.0
        %1603 = vmatmul.mubr.f32.gmra.mxu0 %v1493
        %v1604 = vpop.f32.mrf.mxu0
        %v1605 = vadd.f32 0.0, %v1604
        %v1606 = vpop.f32.mrf.mxu0
        %1607 = vmatprep.mubr.f32.mxu0 0.0
        %1608 = vmatmul.mubr.f32.gmra.mxu0 %v1494
        %v1609 = vpop.f32.mrf.mxu0
        %v1610 = vadd.f32 0.0, %v1609
        %v1611 = vpop.f32.mrf.mxu0
        %1612 = vmatprep.mubr.f32.mxu0 0.0
        %1613 = vmatmul.mubr.f32.gmra.mxu0 %v1495
        %v1614 = vpop.f32.mrf.mxu0
        %v1615 = vadd.f32 0.0, %v1614
        %v1616 = vpop.f32.mrf.mxu0
        %1617 = vmatprep.mubr.f32.mxu0 0.0
        %1618 = vmatmul.mubr.f32.gmra.mxu0 %v1496
        %v1619 = vpop.f32.mrf.mxu0
        %v1620 = vadd.f32 0.0, %v1619
        %v1621 = vpop.f32.mrf.mxu0
        %1622 = vmatprep.mubr.f32.mxu0 0.0
        %1623 = vmatmul.mubr.f32.gmra.mxu0 %v1497
        %v1624 = vpop.f32.mrf.mxu0
        %v1625 = vadd.f32 0.0, %v1624
        %v1626 = vpop.f32.mrf.mxu0
        %1627 = vmatprep.mubr.f32.mxu0 0.0
        %1628 = vmatmul.mubr.f32.gmra.mxu0 %v1498
        %v1629 = vpop.f32.mrf.mxu0
        %v1630 = vadd.f32 0.0, %v1629
        %v1631 = vpop.f32.mrf.mxu0
        %1632 = vmatprep.mubr.f32.mxu0 0.0
        %1633 = vmatmul.mubr.f32.gmra.mxu0 %v1499
        %v1634 = vpop.f32.mrf.mxu0
        %v1635 = vadd.f32 0.0, %v1634
        %v1636 = vpop.f32.mrf.mxu0
        %1637 = vmatprep.mubr.f32.mxu0 0.0
        %1638 = vmatmul.mubr.f32.gmra.mxu0 %v1500
        %v1639 = vpop.f32.mrf.mxu0
        %v1640 = vadd.f32 0.0, %v1639
        %v1641 = vpop.f32.mrf.mxu0
        %1642 = vmatprep.mubr.f32.mxu0 0.0
        %1643 = vmatmul.mubr.f32.gmra.mxu0 %v1501
        %v1644 = vpop.f32.mrf.mxu0
        %v1645 = vadd.f32 0.0, %v1644
        %v1646 = vpop.f32.mrf.mxu0
        %1647 = vmatprep.mubr.f32.mxu0 0.0
        %1648 = vmatmul.mubr.f32.gmra.mxu0 %v1502
        %v1649 = vpop.f32.mrf.mxu0
        %v1650 = vadd.f32 0.0, %v1649
        %v1651 = vpop.f32.mrf.mxu0
        %1652 = vmatprep.mubr.f32.mxu0 0.0
        %1653 = vmatmul.mubr.f32.gmra.mxu0 %v1503
        %v1654 = vpop.f32.mrf.mxu0
        %v1655 = vadd.f32 0.0, %v1654
        %v1656 = vpop.f32.mrf.mxu0
        %1657 = vmatprep.mubr.f32.mxu0 0.0
        %1658 = vmatmul.mubr.f32.gmra.mxu0 %v1504
        %v1659 = vpop.f32.mrf.mxu0
        %v1660 = vadd.f32 0.0, %v1659
        %v1661 = vpop.f32.mrf.mxu0
        %1662 = vmatprep.mubr.f32.mxu0 0.0
        %1663 = vmatmul.mubr.f32.gmra.mxu0 %v1505
        %v1664 = vpop.f32.mrf.mxu0
        %v1665 = vadd.f32 0.0, %v1664
        %v1666 = vpop.f32.mrf.mxu0
        %1667 = vdwg.mxu0
        %v1668 = vadd.f32 %v1473, %v1590
        %v1669 = vadd.f32 %v1474, %v1595
        %v1670 = vadd.f32 %v1475, %v1600
        %v1671 = vadd.f32 %v1476, %v1605
        %v1672 = vadd.f32 %v1477, %v1610
        %v1673 = vadd.f32 %v1478, %v1615
        %v1674 = vadd.f32 %v1479, %v1620
        %v1675 = vadd.f32 %v1480, %v1625
        %v1676 = vadd.f32 %v1481, %v1630
        %v1677 = vadd.f32 %v1482, %v1635
        %v1678 = vadd.f32 %v1483, %v1640
        %v1679 = vadd.f32 %v1484, %v1645
        %v1680 = vadd.f32 %v1485, %v1650
        %v1681 = vadd.f32 %v1486, %v1655
        %v1682 = vadd.f32 %v1487, %v1660
        %v1683 = vadd.f32 %v1488, %v1665
        %v1684 = vld [vmem:[%s1489 + $0x1] sm:$0xff]
        %v1685 = vld [vmem:[%s1489 + $0x9] sm:$0xff]
        %v1686 = vld [vmem:[%s1489 + $0x19] sm:$0xff]
        %v1687 = vld [vmem:[%s1489 + $0x21] sm:$0xff]
        %v1688 = vld [vmem:[%s1489 + $0x31] sm:$0xff]
        %v1689 = vld [vmem:[%s1489 + $0x39] sm:$0xff]
        %v1690 = vld [vmem:[%s1489 + $0x49] sm:$0xff]
        %v1691 = vld [vmem:[%s1489 + $0x51] sm:$0xff]
        %v1692 = vld [vmem:[%s1489 + $0x61] sm:$0xff]
        %v1693 = vld [vmem:[%s1489 + $0x69] sm:$0xff]
        %v1694 = vld [vmem:[%s1489 + $0x79] sm:$0xff]
        %v1695 = vld [vmem:[%s1489 + $0x81] sm:$0xff]
        %v1696 = vld [vmem:[%s1489 + $0x91] sm:$0xff]
        %v1697 = vld [vmem:[%s1489 + $0x99] sm:$0xff]
        %v1698 = vld [vmem:[%s1489 + $0xa9] sm:$0xff]
        %v1699 = vld [vmem:[%s1489 + $0xb1] sm:$0xff]
        %s1700 = scalar_lea.vmem %s2, 896
        %v1701 = vld [vmem:[%s1700] sm:$0xff]
        %v1702 = vld [vmem:[%s1700 + $0x8] sm:$0xff]
        %v1703 = vld [vmem:[%s1700 + $0x10] sm:$0xff]
        %v1704 = vld [vmem:[%s1700 + $0x18] sm:$0xff]
        %v1705 = vld [vmem:[%s1700 + $0x20] sm:$0xff]
        %v1706 = vld [vmem:[%s1700 + $0x28] sm:$0xff]
        %v1707 = vld [vmem:[%s1700 + $0x30] sm:$0xff]
        %v1708 = vld [vmem:[%s1700 + $0x38] sm:$0xff]
        %v1709 = vld [vmem:[%s1700 + $0x40] sm:$0xff]
        %v1710 = vld [vmem:[%s1700 + $0x48] sm:$0xff]
        %v1711 = vld [vmem:[%s1700 + $0x50] sm:$0xff]
        %v1712 = vld [vmem:[%s1700 + $0x58] sm:$0xff]
        %v1713 = vld [vmem:[%s1700 + $0x60] sm:$0xff]
        %v1714 = vld [vmem:[%s1700 + $0x68] sm:$0xff]
        %v1715 = vld [vmem:[%s1700 + $0x70] sm:$0xff]
        %v1716 = vld [vmem:[%s1700 + $0x78] sm:$0xff]
        %1717 = vmatprep.subr.mxu0 0.0
        %1718 = vmatpush1.msra.mxu0 %v1716
        %1719 = vmatprep.subr.mxu0 0.0
        %1720 = vmatpush1.msra.mxu0 %v1715
        %1721 = vmatprep.subr.mxu0 0.0
        %1722 = vmatpush1.msra.mxu0 %v1714
        %1723 = vmatprep.subr.mxu0 0.0
        %1724 = vmatpush1.msra.mxu0 %v1713
        %1725 = vmatprep.subr.mxu0 0.0
        %1726 = vmatpush1.msra.mxu0 %v1712
        %1727 = vmatprep.subr.mxu0 0.0
        %1728 = vmatpush1.msra.mxu0 %v1711
        %1729 = vmatprep.subr.mxu0 0.0
        %1730 = vmatpush1.msra.mxu0 %v1710
        %1731 = vmatprep.subr.mxu0 0.0
        %1732 = vmatpush1.msra.mxu0 %v1709
        %1733 = vmatprep.subr.mxu0 0.0
        %1734 = vmatpush1.msra.mxu0 %v1708
        %1735 = vmatprep.subr.mxu0 0.0
        %1736 = vmatpush1.msra.mxu0 %v1707
        %1737 = vmatprep.subr.mxu0 0.0
        %1738 = vmatpush1.msra.mxu0 %v1706
        %1739 = vmatprep.subr.mxu0 0.0
        %1740 = vmatpush1.msra.mxu0 %v1705
        %1741 = vmatprep.subr.mxu0 0.0
        %1742 = vmatpush1.msra.mxu0 %v1704
        %1743 = vmatprep.subr.mxu0 0.0
        %1744 = vmatpush1.msra.mxu0 %v1703
        %1745 = vmatprep.subr.mxu0 0.0
        %1746 = vmatpush1.msra.mxu0 %v1702
        %1747 = vmatprep.subr.mxu0 0.0
        %1748 = vmatpush1.msra.mxu0 %v1701
        %1749 = vmatprep.subr.mxu0 0.0
        %1750 = vmatpush2.msra.mxu0 0.0
        %1751 = vmatprep.subr.mxu0 0.0
        %1752 = vmatpush2.msra.mxu0 0.0
        %1753 = vmatprep.subr.mxu0 0.0
        %1754 = vmatpush2.msra.mxu0 0.0
        %1755 = vmatprep.subr.mxu0 0.0
        %1756 = vmatpush2.msra.mxu0 0.0
        %1757 = vmatprep.subr.mxu0 0.0
        %1758 = vmatpush2.msra.mxu0 0.0
        %1759 = vmatprep.subr.mxu0 0.0
        %1760 = vmatpush2.msra.mxu0 0.0
        %1761 = vmatprep.subr.mxu0 0.0
        %1762 = vmatpush2.msra.mxu0 0.0
        %1763 = vmatprep.subr.mxu0 0.0
        %1764 = vmatpush2.msra.mxu0 0.0
        %1765 = vmatprep.subr.mxu0 0.0
        %1766 = vmatpush2.msra.mxu0 0.0
        %1767 = vmatprep.subr.mxu0 0.0
        %1768 = vmatpush2.msra.mxu0 0.0
        %1769 = vmatprep.subr.mxu0 0.0
        %1770 = vmatpush2.msra.mxu0 0.0
        %1771 = vmatprep.subr.mxu0 0.0
        %1772 = vmatpush2.msra.mxu0 0.0
        %1773 = vmatprep.subr.mxu0 0.0
        %1774 = vmatpush2.msra.mxu0 0.0
        %1775 = vmatprep.subr.mxu0 0.0
        %1776 = vmatpush2.msra.mxu0 0.0
        %1777 = vmatprep.subr.mxu0 0.0
        %1778 = vmatpush2.msra.mxu0 0.0
        %1779 = vmatprep.subr.mxu0 0.0
        %1780 = vmatpush2.msra.mxu0 0.0
        %1781 = vmatprep.mubr.f32.mxu0 0.0
        %1782 = vmatmul.mubr.f32.gmra.mxu0 %v1684
        %v1783 = vpop.f32.mrf.mxu0
        %v1784 = vadd.f32 0.0, %v1783
        %v1785 = vpop.f32.mrf.mxu0
        %1786 = vmatprep.mubr.f32.mxu0 0.0
        %1787 = vmatmul.mubr.f32.gmra.mxu0 %v1685
        %v1788 = vpop.f32.mrf.mxu0
        %v1789 = vadd.f32 0.0, %v1788
        %v1790 = vpop.f32.mrf.mxu0
        %1791 = vmatprep.mubr.f32.mxu0 0.0
        %1792 = vmatmul.mubr.f32.gmra.mxu0 %v1686
        %v1793 = vpop.f32.mrf.mxu0
        %v1794 = vadd.f32 0.0, %v1793
        %v1795 = vpop.f32.mrf.mxu0
        %1796 = vmatprep.mubr.f32.mxu0 0.0
        %1797 = vmatmul.mubr.f32.gmra.mxu0 %v1687
        %v1798 = vpop.f32.mrf.mxu0
        %v1799 = vadd.f32 0.0, %v1798
        %v1800 = vpop.f32.mrf.mxu0
        %1801 = vmatprep.mubr.f32.mxu0 0.0
        %1802 = vmatmul.mubr.f32.gmra.mxu0 %v1688
        %v1803 = vpop.f32.mrf.mxu0
        %v1804 = vadd.f32 0.0, %v1803
        %v1805 = vpop.f32.mrf.mxu0
        %1806 = vmatprep.mubr.f32.mxu0 0.0
        %1807 = vmatmul.mubr.f32.gmra.mxu0 %v1689
        %v1808 = vpop.f32.mrf.mxu0
        %v1809 = vadd.f32 0.0, %v1808
        %v1810 = vpop.f32.mrf.mxu0
        %1811 = vmatprep.mubr.f32.mxu0 0.0
        %1812 = vmatmul.mubr.f32.gmra.mxu0 %v1690
        %v1813 = vpop.f32.mrf.mxu0
        %v1814 = vadd.f32 0.0, %v1813
        %v1815 = vpop.f32.mrf.mxu0
        %1816 = vmatprep.mubr.f32.mxu0 0.0
        %1817 = vmatmul.mubr.f32.gmra.mxu0 %v1691
        %v1818 = vpop.f32.mrf.mxu0
        %v1819 = vadd.f32 0.0, %v1818
        %v1820 = vpop.f32.mrf.mxu0
        %1821 = vmatprep.mubr.f32.mxu0 0.0
        %1822 = vmatmul.mubr.f32.gmra.mxu0 %v1692
        %v1823 = vpop.f32.mrf.mxu0
        %v1824 = vadd.f32 0.0, %v1823
        %v1825 = vpop.f32.mrf.mxu0
        %1826 = vmatprep.mubr.f32.mxu0 0.0
        %1827 = vmatmul.mubr.f32.gmra.mxu0 %v1693
        %v1828 = vpop.f32.mrf.mxu0
        %v1829 = vadd.f32 0.0, %v1828
        %v1830 = vpop.f32.mrf.mxu0
        %1831 = vmatprep.mubr.f32.mxu0 0.0
        %1832 = vmatmul.mubr.f32.gmra.mxu0 %v1694
        %v1833 = vpop.f32.mrf.mxu0
        %v1834 = vadd.f32 0.0, %v1833
        %v1835 = vpop.f32.mrf.mxu0
        %1836 = vmatprep.mubr.f32.mxu0 0.0
        %1837 = vmatmul.mubr.f32.gmra.mxu0 %v1695
        %v1838 = vpop.f32.mrf.mxu0
        %v1839 = vadd.f32 0.0, %v1838
        %v1840 = vpop.f32.mrf.mxu0
        %1841 = vmatprep.mubr.f32.mxu0 0.0
        %1842 = vmatmul.mubr.f32.gmra.mxu0 %v1696
        %v1843 = vpop.f32.mrf.mxu0
        %v1844 = vadd.f32 0.0, %v1843
        %v1845 = vpop.f32.mrf.mxu0
        %1846 = vmatprep.mubr.f32.mxu0 0.0
        %1847 = vmatmul.mubr.f32.gmra.mxu0 %v1697
        %v1848 = vpop.f32.mrf.mxu0
        %v1849 = vadd.f32 0.0, %v1848
        %v1850 = vpop.f32.mrf.mxu0
        %1851 = vmatprep.mubr.f32.mxu0 0.0
        %1852 = vmatmul.mubr.f32.gmra.mxu0 %v1698
        %v1853 = vpop.f32.mrf.mxu0
        %v1854 = vadd.f32 0.0, %v1853
        %v1855 = vpop.f32.mrf.mxu0
        %1856 = vmatprep.mubr.f32.mxu0 0.0
        %1857 = vmatmul.mubr.f32.gmra.mxu0 %v1699
        %v1858 = vpop.f32.mrf.mxu0
        %v1859 = vadd.f32 0.0, %v1858
        %v1860 = vpop.f32.mrf.mxu0
        %1861 = vdwg.mxu0
        %v1862 = vadd.f32 %v1668, %v1784
        %v1863 = vadd.f32 %v1669, %v1789
        %v1864 = vadd.f32 %v1670, %v1794
        %v1865 = vadd.f32 %v1671, %v1799
        %v1866 = vadd.f32 %v1672, %v1804
        %v1867 = vadd.f32 %v1673, %v1809
        %v1868 = vadd.f32 %v1674, %v1814
        %v1869 = vadd.f32 %v1675, %v1819
        %v1870 = vadd.f32 %v1676, %v1824
        %v1871 = vadd.f32 %v1677, %v1829
        %v1872 = vadd.f32 %v1678, %v1834
        %v1873 = vadd.f32 %v1679, %v1839
        %v1874 = vadd.f32 %v1680, %v1844
        %v1875 = vadd.f32 %v1681, %v1849
        %v1876 = vadd.f32 %v1682, %v1854
        %v1877 = vadd.f32 %v1683, %v1859
        %v1878 = vld [vmem:[%s1489 + $0x2] sm:$0xff]
        %v1879 = vld [vmem:[%s1489 + $0xa] sm:$0xff]
        %v1880 = vld [vmem:[%s1489 + $0x1a] sm:$0xff]
        %v1881 = vld [vmem:[%s1489 + $0x22] sm:$0xff]
        %v1882 = vld [vmem:[%s1489 + $0x32] sm:$0xff]
        %v1883 = vld [vmem:[%s1489 + $0x3a] sm:$0xff]
        %v1884 = vld [vmem:[%s1489 + $0x4a] sm:$0xff]
        %v1885 = vld [vmem:[%s1489 + $0x52] sm:$0xff]
        %v1886 = vld [vmem:[%s1489 + $0x62] sm:$0xff]
        %v1887 = vld [vmem:[%s1489 + $0x6a] sm:$0xff]
        %v1888 = vld [vmem:[%s1489 + $0x7a] sm:$0xff]
        %v1889 = vld [vmem:[%s1489 + $0x82] sm:$0xff]
        %v1890 = vld [vmem:[%s1489 + $0x92] sm:$0xff]
        %v1891 = vld [vmem:[%s1489 + $0x9a] sm:$0xff]
        %v1892 = vld [vmem:[%s1489 + $0xaa] sm:$0xff]
        %v1893 = vld [vmem:[%s1489 + $0xb2] sm:$0xff]
        %s1894 = scalar_lea.vmem %s2, 1024
        %v1895 = vld [vmem:[%s1894] sm:$0xff]
        %v1896 = vld [vmem:[%s1894 + $0x8] sm:$0xff]
        %v1897 = vld [vmem:[%s1894 + $0x10] sm:$0xff]
        %v1898 = vld [vmem:[%s1894 + $0x18] sm:$0xff]
        %v1899 = vld [vmem:[%s1894 + $0x20] sm:$0xff]
        %v1900 = vld [vmem:[%s1894 + $0x28] sm:$0xff]
        %v1901 = vld [vmem:[%s1894 + $0x30] sm:$0xff]
        %v1902 = vld [vmem:[%s1894 + $0x38] sm:$0xff]
        %v1903 = vld [vmem:[%s1894 + $0x40] sm:$0xff]
        %v1904 = vld [vmem:[%s1894 + $0x48] sm:$0xff]
        %v1905 = vld [vmem:[%s1894 + $0x50] sm:$0xff]
        %v1906 = vld [vmem:[%s1894 + $0x58] sm:$0xff]
        %v1907 = vld [vmem:[%s1894 + $0x60] sm:$0xff]
        %v1908 = vld [vmem:[%s1894 + $0x68] sm:$0xff]
        %v1909 = vld [vmem:[%s1894 + $0x70] sm:$0xff]
        %v1910 = vld [vmem:[%s1894 + $0x78] sm:$0xff]
        %1911 = vmatprep.subr.mxu0 0.0
        %1912 = vmatpush1.msra.mxu0 %v1910
        %1913 = vmatprep.subr.mxu0 0.0
        %1914 = vmatpush1.msra.mxu0 %v1909
        %1915 = vmatprep.subr.mxu0 0.0
        %1916 = vmatpush1.msra.mxu0 %v1908
        %1917 = vmatprep.subr.mxu0 0.0
        %1918 = vmatpush1.msra.mxu0 %v1907
        %1919 = vmatprep.subr.mxu0 0.0
        %1920 = vmatpush1.msra.mxu0 %v1906
        %1921 = vmatprep.subr.mxu0 0.0
        %1922 = vmatpush1.msra.mxu0 %v1905
        %1923 = vmatprep.subr.mxu0 0.0
        %1924 = vmatpush1.msra.mxu0 %v1904
        %1925 = vmatprep.subr.mxu0 0.0
        %1926 = vmatpush1.msra.mxu0 %v1903
        %1927 = vmatprep.subr.mxu0 0.0
        %1928 = vmatpush1.msra.mxu0 %v1902
        %1929 = vmatprep.subr.mxu0 0.0
        %1930 = vmatpush1.msra.mxu0 %v1901
        %1931 = vmatprep.subr.mxu0 0.0
        %1932 = vmatpush1.msra.mxu0 %v1900
        %1933 = vmatprep.subr.mxu0 0.0
        %1934 = vmatpush1.msra.mxu0 %v1899
        %1935 = vmatprep.subr.mxu0 0.0
        %1936 = vmatpush1.msra.mxu0 %v1898
        %1937 = vmatprep.subr.mxu0 0.0
        %1938 = vmatpush1.msra.mxu0 %v1897
        %1939 = vmatprep.subr.mxu0 0.0
        %1940 = vmatpush1.msra.mxu0 %v1896
        %1941 = vmatprep.subr.mxu0 0.0
        %1942 = vmatpush1.msra.mxu0 %v1895
        %1943 = vmatprep.subr.mxu0 0.0
        %1944 = vmatpush2.msra.mxu0 0.0
        %1945 = vmatprep.subr.mxu0 0.0
        %1946 = vmatpush2.msra.mxu0 0.0
        %1947 = vmatprep.subr.mxu0 0.0
        %1948 = vmatpush2.msra.mxu0 0.0
        %1949 = vmatprep.subr.mxu0 0.0
        %1950 = vmatpush2.msra.mxu0 0.0
        %1951 = vmatprep.subr.mxu0 0.0
        %1952 = vmatpush2.msra.mxu0 0.0
        %1953 = vmatprep.subr.mxu0 0.0
        %1954 = vmatpush2.msra.mxu0 0.0
        %1955 = vmatprep.subr.mxu0 0.0
        %1956 = vmatpush2.msra.mxu0 0.0
        %1957 = vmatprep.subr.mxu0 0.0
        %1958 = vmatpush2.msra.mxu0 0.0
        %1959 = vmatprep.subr.mxu0 0.0
        %1960 = vmatpush2.msra.mxu0 0.0
        %1961 = vmatprep.subr.mxu0 0.0
        %1962 = vmatpush2.msra.mxu0 0.0
        %1963 = vmatprep.subr.mxu0 0.0
        %1964 = vmatpush2.msra.mxu0 0.0
        %1965 = vmatprep.subr.mxu0 0.0
        %1966 = vmatpush2.msra.mxu0 0.0
        %1967 = vmatprep.subr.mxu0 0.0
        %1968 = vmatpush2.msra.mxu0 0.0
        %1969 = vmatprep.subr.mxu0 0.0
        %1970 = vmatpush2.msra.mxu0 0.0
        %1971 = vmatprep.subr.mxu0 0.0
        %1972 = vmatpush2.msra.mxu0 0.0
        %1973 = vmatprep.subr.mxu0 0.0
        %1974 = vmatpush2.msra.mxu0 0.0
        %1975 = vmatprep.mubr.f32.mxu0 0.0
        %1976 = vmatmul.mubr.f32.gmra.mxu0 %v1878
        %v1977 = vpop.f32.mrf.mxu0
        %v1978 = vadd.f32 0.0, %v1977
        %v1979 = vpop.f32.mrf.mxu0
        %1980 = vmatprep.mubr.f32.mxu0 0.0
        %1981 = vmatmul.mubr.f32.gmra.mxu0 %v1879
        %v1982 = vpop.f32.mrf.mxu0
        %v1983 = vadd.f32 0.0, %v1982
        %v1984 = vpop.f32.mrf.mxu0
        %1985 = vmatprep.mubr.f32.mxu0 0.0
        %1986 = vmatmul.mubr.f32.gmra.mxu0 %v1880
        %v1987 = vpop.f32.mrf.mxu0
        %v1988 = vadd.f32 0.0, %v1987
        %v1989 = vpop.f32.mrf.mxu0
        %1990 = vmatprep.mubr.f32.mxu0 0.0
        %1991 = vmatmul.mubr.f32.gmra.mxu0 %v1881
        %v1992 = vpop.f32.mrf.mxu0
        %v1993 = vadd.f32 0.0, %v1992
        %v1994 = vpop.f32.mrf.mxu0
        %1995 = vmatprep.mubr.f32.mxu0 0.0
        %1996 = vmatmul.mubr.f32.gmra.mxu0 %v1882
        %v1997 = vpop.f32.mrf.mxu0
        %v1998 = vadd.f32 0.0, %v1997
        %v1999 = vpop.f32.mrf.mxu0
        %2000 = vmatprep.mubr.f32.mxu0 0.0
        %2001 = vmatmul.mubr.f32.gmra.mxu0 %v1883
        %v2002 = vpop.f32.mrf.mxu0
        %v2003 = vadd.f32 0.0, %v2002
        %v2004 = vpop.f32.mrf.mxu0
        %2005 = vmatprep.mubr.f32.mxu0 0.0
        %2006 = vmatmul.mubr.f32.gmra.mxu0 %v1884
        %v2007 = vpop.f32.mrf.mxu0
        %v2008 = vadd.f32 0.0, %v2007
        %v2009 = vpop.f32.mrf.mxu0
        %2010 = vmatprep.mubr.f32.mxu0 0.0
        %2011 = vmatmul.mubr.f32.gmra.mxu0 %v1885
        %v2012 = vpop.f32.mrf.mxu0
        %v2013 = vadd.f32 0.0, %v2012
        %v2014 = vpop.f32.mrf.mxu0
        %2015 = vmatprep.mubr.f32.mxu0 0.0
        %2016 = vmatmul.mubr.f32.gmra.mxu0 %v1886
        %v2017 = vpop.f32.mrf.mxu0
        %v2018 = vadd.f32 0.0, %v2017
        %v2019 = vpop.f32.mrf.mxu0
        %2020 = vmatprep.mubr.f32.mxu0 0.0
        %2021 = vmatmul.mubr.f32.gmra.mxu0 %v1887
        %v2022 = vpop.f32.mrf.mxu0
        %v2023 = vadd.f32 0.0, %v2022
        %v2024 = vpop.f32.mrf.mxu0
        %2025 = vmatprep.mubr.f32.mxu0 0.0
        %2026 = vmatmul.mubr.f32.gmra.mxu0 %v1888
        %v2027 = vpop.f32.mrf.mxu0
        %v2028 = vadd.f32 0.0, %v2027
        %v2029 = vpop.f32.mrf.mxu0
        %2030 = vmatprep.mubr.f32.mxu0 0.0
        %2031 = vmatmul.mubr.f32.gmra.mxu0 %v1889
        %v2032 = vpop.f32.mrf.mxu0
        %v2033 = vadd.f32 0.0, %v2032
        %v2034 = vpop.f32.mrf.mxu0
        %2035 = vmatprep.mubr.f32.mxu0 0.0
        %2036 = vmatmul.mubr.f32.gmra.mxu0 %v1890
        %v2037 = vpop.f32.mrf.mxu0
        %v2038 = vadd.f32 0.0, %v2037
        %v2039 = vpop.f32.mrf.mxu0
        %2040 = vmatprep.mubr.f32.mxu0 0.0
        %2041 = vmatmul.mubr.f32.gmra.mxu0 %v1891
        %v2042 = vpop.f32.mrf.mxu0
        %v2043 = vadd.f32 0.0, %v2042
        %v2044 = vpop.f32.mrf.mxu0
        %2045 = vmatprep.mubr.f32.mxu0 0.0
        %2046 = vmatmul.mubr.f32.gmra.mxu0 %v1892
        %v2047 = vpop.f32.mrf.mxu0
        %v2048 = vadd.f32 0.0, %v2047
        %v2049 = vpop.f32.mrf.mxu0
        %2050 = vmatprep.mubr.f32.mxu0 0.0
        %2051 = vmatmul.mubr.f32.gmra.mxu0 %v1893
        %v2052 = vpop.f32.mrf.mxu0
        %v2053 = vadd.f32 0.0, %v2052
        %v2054 = vpop.f32.mrf.mxu0
        %2055 = vdwg.mxu0
        %v2056 = vadd.f32 %v1862, %v1978
        %v2057 = vadd.f32 %v1863, %v1983
        %v2058 = vadd.f32 %v1864, %v1988
        %v2059 = vadd.f32 %v1865, %v1993
        %v2060 = vadd.f32 %v1866, %v1998
        %v2061 = vadd.f32 %v1867, %v2003
        %v2062 = vadd.f32 %v1868, %v2008
        %v2063 = vadd.f32 %v1869, %v2013
        %v2064 = vadd.f32 %v1870, %v2018
        %v2065 = vadd.f32 %v1871, %v2023
        %v2066 = vadd.f32 %v1872, %v2028
        %v2067 = vadd.f32 %v1873, %v2033
        %v2068 = vadd.f32 %v1874, %v2038
        %v2069 = vadd.f32 %v1875, %v2043
        %v2070 = vadd.f32 %v1876, %v2048
        %v2071 = vadd.f32 %v1877, %v2053
        %2072 = vst [vmem:[%s261] sm:$0xff] %v2056
        %2073 = vst [vmem:[%s261 + $0x8] sm:$0xff] %v2057
        %2074 = vst [vmem:[%s261 + $0x10] sm:$0xff] %v2058
        %2075 = vst [vmem:[%s261 + $0x18] sm:$0xff] %v2059
        %2076 = vst [vmem:[%s261 + $0x20] sm:$0xff] %v2060
        %2077 = vst [vmem:[%s261 + $0x28] sm:$0xff] %v2061
        %2078 = vst [vmem:[%s261 + $0x30] sm:$0xff] %v2062
        %2079 = vst [vmem:[%s261 + $0x38] sm:$0xff] %v2063
        %2080 = vst [vmem:[%s261 + $0x40] sm:$0xff] %v2064
        %2081 = vst [vmem:[%s261 + $0x48] sm:$0xff] %v2065
        %2082 = vst [vmem:[%s261 + $0x50] sm:$0xff] %v2066
        %2083 = vst [vmem:[%s261 + $0x58] sm:$0xff] %v2067
        %2084 = vst [vmem:[%s261 + $0x60] sm:$0xff] %v2068
        %2085 = vst [vmem:[%s261 + $0x68] sm:$0xff] %v2069
        %2086 = vst [vmem:[%s261 + $0x70] sm:$0xff] %v2070
        %2087 = vst [vmem:[%s261 + $0x78] sm:$0xff] %v2071
        %v2088 = vadd.f32 %v2056, %v2057
        %v2089 = vadd.f32 %v2088, %v2058
        %v2090 = vadd.f32 %v2089, %v2059
        %v2091 = vadd.f32 %v2090, %v2060
        %v2092 = vadd.f32 %v2091, %v2061
        %v2093 = vadd.f32 %v2092, %v2062
        %v2094 = vadd.f32 %v2093, %v2063
        %v2095 = vadd.f32 %v2094, %v2064
        %v2096 = vadd.f32 %v2095, %v2065
        %v2097 = vadd.f32 %v2096, %v2066
        %v2098 = vadd.f32 %v2097, %v2067
        %v2099 = vadd.f32 %v2098, %v2068
        %v2100 = vadd.f32 %v2099, %v2069
        %v2101 = vadd.f32 %v2100, %v2070
        %v2102 = vadd.f32 %v2101, %v2071
        %v2103 = vrot.slane %v2102, 4
        %v2104 = vadd.f32 %v2102, %v2103
        %v2105 = vrot.slane %v2104, 2
        %v2106 = vadd.f32 %v2104, %v2105
        %v2107 = vrot.slane %v2106, 1
        %v2108 = vadd.f32 %v2106, %v2107
        %v2109 = vmul.f32 %v2056, %v2056
        %v2110 = vmul.f32 %v2057, %v2057
        %v2111 = vmul.f32 %v2058, %v2058
        %v2112 = vmul.f32 %v2059, %v2059
        %v2113 = vmul.f32 %v2060, %v2060
        %v2114 = vmul.f32 %v2061, %v2061
        %v2115 = vmul.f32 %v2062, %v2062
        %v2116 = vmul.f32 %v2063, %v2063
        %v2117 = vmul.f32 %v2064, %v2064
        %v2118 = vmul.f32 %v2065, %v2065
        %v2119 = vmul.f32 %v2066, %v2066
        %v2120 = vmul.f32 %v2067, %v2067
        %v2121 = vmul.f32 %v2068, %v2068
        %v2122 = vmul.f32 %v2069, %v2069
        %v2123 = vmul.f32 %v2070, %v2070
        %v2124 = vmul.f32 %v2071, %v2071
        %v2125 = vadd.f32 %v2109, %v2110
        %v2126 = vadd.f32 %v2125, %v2111
        %v2127 = vadd.f32 %v2126, %v2112
        %v2128 = vadd.f32 %v2127, %v2113
        %v2129 = vadd.f32 %v2128, %v2114
        %v2130 = vadd.f32 %v2129, %v2115
        %v2131 = vadd.f32 %v2130, %v2116
        %v2132 = vadd.f32 %v2131, %v2117
        %v2133 = vadd.f32 %v2132, %v2118
        %v2134 = vadd.f32 %v2133, %v2119
        %v2135 = vadd.f32 %v2134, %v2120
        %v2136 = vadd.f32 %v2135, %v2121
        %v2137 = vadd.f32 %v2136, %v2122
        %v2138 = vadd.f32 %v2137, %v2123
        %v2139 = vadd.f32 %v2138, %v2124
        %v2140 = vrot.slane %v2139, 4
        %v2141 = vadd.f32 %v2139, %v2140
        %v2142 = vrot.slane %v2141, 2
        %v2143 = vadd.f32 %v2141, %v2142
        %v2144 = vrot.slane %v2143, 1
        %v2145 = vadd.f32 %v2143, %v2144
        %vm2146 = vcmask 1040384
        %v2147 = vsel %vm2146, %v2108, %v2145
        %2148 = vst [vmem:[%s268] sm:$0x3] %v2147
        %s2149 = sand.u32 %s125, 1
        %s2150 = scalar_lea.sflag [#allocation4], %s2149
        %s2151 = sand.u32 %s125, 1
        %s2152 = smul.addr %s2151, 128
        %s2153 = scalar_lea.vmem [#allocation3], %s2152
        %s2154 = sand.u32 %s153, 1
        %s2155 = scalar_lea.sflag [#allocation6], %s2154
        %s2156 = sand.u32 %s153, 1
        %s2157 = smul.addr %s2156, 2
        %s2158 = scalar_lea.vmem [#allocation5], %s2157
        // Predicated region
        $region33: #{tpu_custom_call.1} parent=31 // pred_check
          %p2159 = pneg %p135
        $region34: #{tpu_custom_call.1} parent=31 // pred_check_branch
          %2161 = sbr.rel (%p2159) target = $region36
        $region35: #{tpu_custom_call.1} parent=31 // pred_region
          %s2162 = smul.u32 8, %s27
          %s2164 = ssub.s32 2048, 2048
          %2165 = vsyncadd %s2150, %s2164
          %s2166 = smul.addr %s2162, 2
          %s2167 = smul.addr %s26, 32
          %s2168 = sadd.s32 %s2166, %s2167
          %s2169 = smul.addr %s2168, 128
          %s2170 = scalar_lea.hbm %s3, %s2169
          %s2171 = sshll.u32 %s2153, 4
          %s2172 = int_to_ptr.vmem [resolvable:$true] %s2171
          %2177 = dma.vmem_to_hbm [thread:$0]  %s2172, 2048, %s2170, %s2150, 128, 128, 8
        $region36: #{tpu_custom_call.1} parent=31 // pred_fallthru
          _
        // Predicated region
        $region37: #{tpu_custom_call.1} parent=31 // pred_check
          %p2178 = pneg %p163
        $region38: #{tpu_custom_call.1} parent=31 // pred_check_branch
          %2180 = sbr.rel (%p2178) target = $region40
        $region39: #{tpu_custom_call.1} parent=31 // pred_region
          %s2182 = ssub.s32 32, 32
          %2183 = vsyncadd %s2155, %s2182
          %s2184 = smul.addr %s26, 2
          %s2185 = sadd.s32 %s27, %s2184
          %s2186 = smul.addr %s2185, 32
          %s2187 = scalar_lea.hbm %s4, %s2186
          %s2189 = sshll.u32 %s2158, 4
          %s2190 = int_to_ptr.vmem [resolvable:$true] %s2189
          %2192 = dma.vmem_to_hbm [thread:$0]  %s2190, 32, %s2187, %s2155
        $region40: #{tpu_custom_call.1} parent=31 // pred_fallthru
          _
      $region32: #{tpu_custom_call.1} parent=5 // pred_fallthru
        _
      %p2193 = scmp.le.s32.totalorder 2, %s17
      // Predicated region
      $region41: #{tpu_custom_call.1} parent=5 // pred_check
        %p2194 = pneg %p2193
      $region42: #{tpu_custom_call.1} parent=5 // pred_check_branch
        %2196 = sbr.rel (%p2194) target = $region44
      $region43: #{tpu_custom_call.1} parent=5 // pred_region
        %s2197 = ssub.s32 %s17, 2
        // Predicated region
        $region45: #{tpu_custom_call.1} parent=43 // pred_check
          %p2198 = pneg %p141
        $region46: #{tpu_custom_call.1} parent=43 // pred_check_branch
          %2200 = sbr.rel (%p2198) target = $region48
        $region47: #{tpu_custom_call.1} parent=43 // pred_region
          %s2201 = sand.u32 %s126, 1
          %s2202 = scalar_lea.sflag [#allocation4], %s2201
          %s2203 = sand.u32 %s126, 1
          %s2204 = smul.addr %s2203, 128
          %s2205 = scalar_lea.vmem [#allocation3], %s2204
          %2206 = dma.done %s2202, 2048
        $region48: #{tpu_custom_call.1} parent=43 // pred_fallthru
          _
        // Predicated region
        $region49: #{tpu_custom_call.1} parent=43 // pred_check
          %p2207 = pneg %p169
        $region50: #{tpu_custom_call.1} parent=43 // pred_check_branch
          %2209 = sbr.rel (%p2207) target = $region52
        $region51: #{tpu_custom_call.1} parent=43 // pred_region
          %s2210 = sand.u32 %s154, 1
          %s2211 = scalar_lea.sflag [#allocation6], %s2210
          %s2212 = sand.u32 %s154, 1
          %s2213 = smul.addr %s2212, 2
          %s2214 = scalar_lea.vmem [#allocation5], %s2213
          %2215 = dma.done %s2211, 32
        $region52: #{tpu_custom_call.1} parent=43 // pred_fallthru
          _
      $region44: #{tpu_custom_call.1} parent=5 // pred_fallthru
        _
    $region6: #{tpu_custom_call.1} parent=1 // loop_footer
      %s21 = sadd.s32 1, %s17
    $region7: #{tpu_custom_call.1} parent=1 // loop_footer_branch
      %16 = sbr.rel target = $region3
    $region8: #{tpu_custom_call.1} parent=1 // loop_exit
      _
    %2216 = vsyncpa [#allocation4], 1
    %s2217 = scalar_lea.sflag [#allocation4], 1
    %2218 = vsyncpa %s2217, 1
    %2219 = vsyncpa [#allocation6], 1
    %s2220 = scalar_lea.sflag [#allocation6], 1
    %2221 = vsyncpa %s2220, 1

</llo_original>
